<compile_context>
chip_gen: v5e
topology: v5e:2x2
jax: 0.10.0
libtpu: 0.0.40
codegen_flags: <defaults>
</compile_context>

<pallas_src>
import functools
import math

import jax
import jax.numpy as jnp
from jax import lax
from jax.experimental import pallas as pl
from jax.experimental.pallas import tpu as pltpu

LOG_2PI = math.log(2.0 * math.pi)


# ----------------------------------------------------------------------------
# Per-tree fused kernel: fixpoint + MeanStdPooling MLP + reparameterised sample
# ----------------------------------------------------------------------------
def _gnn_branch_kernel(bnbr_ref, mnbr_ref, par_ref, eps_ref,
                       w1_ref, b1_ref, w2_ref, b2_ref, w3_ref, b3_ref,
                       samp_ref, logq_ref,
                       *, ntips, n_edges, tol, max_iters, check_every, log2_ce):
    f32 = jnp.float32
    nf = ntips
    dim = ntips - 2
    E = n_edges
    E_pad = eps_ref.shape[-1]

    # ---- per-tree neighbour-averaging operator built from the neighbour lists -------
    # Transposed layout: X is (nf, dim); one fixpoint step is  X <- Bt + X @ Mt,
    # reproducing "mean over 3 neighbours, leaves fixed at eye(ntips)".
    bnbr = bnbr_ref[0]                                       # (3, dim) leaf ids or -1
    mnbr = mnbr_ref[0]                                       # (3, dim) internal ids or -1
    row_nf_d = lax.broadcasted_iota(jnp.int32, (nf, dim), 0)
    row_dd = lax.broadcasted_iota(jnp.int32, (dim, dim), 0)
    Bt = jnp.zeros((nf, dim), f32)
    Mt = jnp.zeros((dim, dim), f32)
    for j in range(3):
        Bt = Bt + (bnbr[j:j + 1, :] == row_nf_d).astype(f32)
        Mt = Mt + (mnbr[j:j + 1, :] == row_dd).astype(f32)
    Bt = Bt * f32(1.0 / 3.0)
    Mt = Mt * f32(1.0 / 3.0)

    # ---- collapse check_every dependent steps into one:  X <- Beff + X @ Mpow -------
    # Beff = Bt @ (I + Mt + ... + Mt^(ce-1)),  Mpow = Mt^ce   (log2(ce) squarings).
    Beff, Mpow = Bt, Mt
    for _ in range(log2_ce):
        Beff = Beff + jnp.dot(Beff, Mpow, preferred_element_type=f32)
        Mpow = jnp.dot(Mpow, Mpow, preferred_element_type=f32)

    x0 = jnp.full((nf, dim), 1.0 / nf, f32)
    inv_nd = f32(1.0 / (nf * dim))

    def cond(carry):
        _, it, delta = carry
        return jnp.logical_and(it < max_iters, delta > tol)

    def body(carry):
        x, it, _ = carry
        xn = Beff + jnp.dot(x, Mpow, preferred_element_type=f32)
        delta = jnp.sum(jnp.abs(xn - x)) * inv_nd           # per-tree mean|dX| per block
        return xn, it + check_every, delta

    x, _, _ = lax.while_loop(cond, body, (x0, jnp.int32(0), jnp.float32(jnp.inf)))

    # ---- child / parent features via one-hot selection (kept in VMEM) ----------------
    # Column e of childT/parentT is edge e; features live on sublanes, edges on lanes.
    row_nf = lax.broadcasted_iota(jnp.int32, (nf, E_pad), 0)
    lane_nf = lax.broadcasted_iota(jnp.int32, (nf, E_pad), 1)
    row_d = lax.broadcasted_iota(jnp.int32, (dim, E_pad), 0)
    lane_d = lax.broadcasted_iota(jnp.int32, (dim, E_pad), 1)
    par = par_ref[0]                                          # (1, E_pad), -1 on padding

    child_leaf = (lane_nf == row_nf).astype(f32)              # child e < nf is leaf e
    Gc = jnp.logical_and(lane_d - nf == row_d, lane_d < E).astype(f32)   # internal child
    Lp = (par == row_nf).astype(f32)                          # parent is leaf (never valid)
    Gp = (par - nf == row_d).astype(f32)                      # parent is internal

    childT = child_leaf + jnp.dot(x, Gc, preferred_element_type=f32)     # (nf, E_pad)
    parentT = Lp + jnp.dot(x, Gp, preferred_element_type=f32)            # (nf, E_pad)
    feat = jnp.concatenate([childT, parentT], axis=0)                    # (2*nf, E_pad)
    # TODO(synk): for large ntips replace the one-hot gathers with scalar-prefetch/DMA
    # gathers instead of O(ntips * E_pad) compare matrices.

    # ---- MeanStdPooling: Linear(2F,H)/ELU/Linear(H,H)/ELU/Linear(H,2) ----------------
    def elu(v):
        return jnp.where(v > 0, v, jnp.exp(jnp.minimum(v, 0.0)) - 1.0)

    h = jnp.dot(w1_ref[...], feat, preferred_element_type=f32) + b1_ref[...]   # (H, E_pad)
    h = elu(h)
    h = jnp.dot(w2_ref[...], h, preferred_element_type=f32) + b2_ref[...]      # (H, E_pad)
    h = elu(h)
    w3 = w3_ref[...]                                                            # (H, 2)
    b3 = b3_ref[...]                                                            # (1, 2)
    mean = jnp.sum(h * w3[:, 0:1], axis=0, keepdims=True) + b3[:, 0:1]          # (1, E_pad)
    std = jnp.sum(h * w3[:, 1:2], axis=0, keepdims=True) + b3[:, 1:2]           # (1, E_pad)

    # ---- reparameterised branch sample + log q (lane-dense stores) -------------------
    eps = eps_ref[0]                                                             # (1, E_pad)
    samp_ref[0] = eps * jnp.exp(std) + mean - 2.0

    valid = (lax.broadcasted_iota(jnp.int32, (1, E_pad), 1) < E).astype(f32)
    term = ((-0.5 * LOG_2PI) - 0.5 * eps * eps - std) * valid
    lsum = jnp.sum(term, axis=1, keepdims=True)                                  # (1, 1)
    logq_ref[0] = lsum + jnp.zeros((1, logq_ref.shape[-1]), f32)                 # broadcast


# ----------------------------------------------------------------------------
# Wrapper
# ----------------------------------------------------------------------------
def gnn_branch_forward(edge_index, params, eps, ntips, tol=1e-5, max_iters=10000,
                       check_every=8):
    """GNN_BranchModel.forward (gnn_type='identity') with externally supplied base noise.

    edge_index : (bs, 2*ntips-2, 3) int32 neighbour lists (-1 padding on leaf rows)
    eps        : (bs, 2*ntips-3)     N(0,1) draws (the torch.randn of sample_branch_base)
    returns    : samp_log_branch (bs, 2*ntips-3), logq_branch (bs,)
    """
    W1, b1, W2, b2, W3, b3 = params
    bs, nnodes, _ = edge_index.shape
    nf, dim = ntips, ntips - 2
    assert nnodes == nf + dim
    E = nnodes - 1
    H = W1.shape[1]
    E_pad = max(128, ((E + 127) // 128) * 128)
    assert check_every > 0 and (check_every & (check_every - 1)) == 0, \
        "check_every must be a power of two"
    log2_ce = check_every.bit_length() - 1

    eidx = edge_index.astype(jnp.int32)
    # neighbour lists of the internal nodes, split into leaf / (local) internal targets
    eint = eidx[:, nf:, :]                                                   # (bs, dim, 3)
    bnbr = jnp.transpose(jnp.where(jnp.logical_and(eint >= 0, eint < nf), eint, -1),
                         (0, 2, 1))                                          # (bs, 3, dim)
    mnbr = jnp.transpose(jnp.where(eint >= nf, eint - nf, -1), (0, 2, 1))    # (bs, 3, dim)

    # per-edge parent index (child index e is just the lane index -> built in-kernel)
    par = eidx[:, :E, 0]                                                     # (bs, E)
    par_pad = jnp.full((bs, 1, E_pad), -1, jnp.int32).at[:, 0, :E].set(par)
    eps_pad = jnp.zeros((bs, 1, E_pad), jnp.float32).at[:, 0, :E].set(
        eps.astype(jnp.float32))

    # weights pre-transposed for (feature-on-sublane, edge-on-lane) layout; layer-1 fused
    w1t = W1.T                      # (H, 2*nf)  columns = [child | parent]
    b1c = b1.reshape(H, 1)
    w2t = W2.T                      # (H, H)
    b2c = b2.reshape(H, 1)
    b3r = b3.reshape(1, 2)

    kern = functools.partial(_gnn_branch_kernel, ntips=ntips, n_edges=E, tol=tol,
                             max_iters=max_iters, check_every=check_every,
                             log2_ce=log2_ce)

    grid_spec = pltpu.PrefetchScalarGridSpec(
        num_scalar_prefetch=0,
        grid=(bs,),
        in_specs=[
            pl.BlockSpec((1, 3, dim), lambda b: (b, 0, 0)),      # bnbr
            pl.BlockSpec((1, 3, dim), lambda b: (b, 0, 0)),      # mnbr
            pl.BlockSpec((1, 1, E_pad), lambda b: (b, 0, 0)),    # parent index
            pl.BlockSpec((1, 1, E_pad), lambda b: (b, 0, 0)),    # eps
            pl.BlockSpec((H, 2 * nf), lambda b: (0, 0)),         # W1^T (resident)
            pl.BlockSpec((H, 1), lambda b: (0, 0)),              # b1
            pl.BlockSpec((H, H), lambda b: (0, 0)),              # W2^T
            pl.BlockSpec((H, 1), lambda b: (0, 0)),              # b2
            pl.BlockSpec((H, 2), lambda b: (0, 0)),              # W3
            pl.BlockSpec((1, 2), lambda b: (0, 0)),              # b3
        ],
        out_specs=(
            pl.BlockSpec((1, 1, E_pad), lambda b: (b, 0, 0)),    # samp (lane-dense)
            pl.BlockSpec((1, 1, 128), lambda b: (b, 0, 0)),      # logq (broadcast slab)
        ),
    )

    # VMEM budget (explicit; defaults are 16 MiB v5e / 32 MiB v6e-v7x) + advisory cost.
    per_tile_bytes = 4 * (2 * 3 * dim + 2 * E_pad            # per-tree inputs
                          + H * 2 * nf + 2 * H + H * H + 2 * H + 2   # weights
                          + E_pad + 128                       # outputs
                          + 3 * H * E_pad + 6 * nf * E_pad)   # intermediates (rough)
    vmem_limit = int(min(48 * 2**20, max(16 * 2**20, 8 * per_tile_bytes)))

    est_blocks = 16                                            # assumed convergence blocks
    flops = bs * int(
        2 * log2_ce * 2 * (dim ** 3 + nf * dim * dim)          # Mt^ce / Beff precompute
        + est_blocks * 2 * nf * dim * dim                      # fixpoint blocks
        + 2 * 2 * nf * dim * E_pad                             # child/parent gathers
        + 2 * (H * 2 * nf + H * H + 2 * H) * E_pad)            # MLP
    transcendentals = bs * (2 * H + 1) * E_pad
    bytes_accessed = int(
        sum(int(a.size) * a.dtype.itemsize
            for a in (bnbr, mnbr, par_pad, eps_pad, w1t, b1c, w2t, b2c, W3, b3r))
        + 4 * bs * (E_pad + 128))

    samp_row, logq_row = pl.pallas_call(
        kern,
        out_shape=(jax.ShapeDtypeStruct((bs, 1, E_pad), jnp.float32),
                   jax.ShapeDtypeStruct((bs, 1, 128), jnp.float32)),
        grid_spec=grid_spec,
        compiler_params=pltpu.CompilerParams(
            dimension_semantics=("parallel",),
            vmem_limit_bytes=vmem_limit),
        cost_estimate=pl.CostEstimate(flops=flops, transcendentals=transcendentals,
                                      bytes_accessed=bytes_accessed),
    )(bnbr, mnbr, par_pad, eps_pad, w1t, b1c, w2t, b2c, W3, b3r)

    # TODO(synk): at very large bs/ntips group several trees per grid step (tb*dim ~ 128)
    # instead of one, re-deriving the tile for v7x's 64 MiB VMEM.
    return samp_row[:, 0, :E], logq_row[:, 0, 0]


# ----------------------------------------------------------------------------
# Deterministic parameter init (MeanStdPooling: Linear(2F,H)/ELU/Linear(H,H)/ELU/Linear(H,2))
# ----------------------------------------------------------------------------
def init_meanstd_params(key, in_features, hidden_dim):
    def linear_init(k, fan_in, w_shape, b_shape):
        kw, kb = jax.random.split(k)
        bound = 1.0 / math.sqrt(fan_in)
        w = jax.random.uniform(kw, w_shape, jnp.float32, -bound, bound)
        b = jax.random.uniform(kb, b_shape, jnp.float32, -bound, bound)
        return w, b

    k1, k2, k3 = jax.random.split(key, 3)
    W1, b1 = linear_init(k1, 2 * in_features, (2 * in_features, hidden_dim), (1, hidden_dim))
    W2, b2 = linear_init(k2, hidden_dim, (hidden_dim, hidden_dim), (1, hidden_dim))
    W3, b3 = linear_init(k3, hidden_dim, (hidden_dim, 2), (1, 2))
    return (W1, b1, W2, b2, W3, b3)


# ----------------------------------------------------------------------------
# Pure-JAX reference (mirrors the PyTorch forward, with the kernel's documented
# per-tree / block-granularity convergence check).
# ----------------------------------------------------------------------------
def reference_forward(edge_index, params, eps, ntips, tol=1e-5, max_iters=10000,
                      check_every=8):
    W1, b1, W2, b2, W3, b3 = params
    bs, nnodes, _ = edge_index.shape
    dim, nf = ntips - 2, ntips
    identity = jnp.eye(nf, dtype=jnp.float32)
    elu = lambda v: jnp.where(v > 0, v, jnp.exp(jnp.minimum(v, 0.0)) - 1.0)
    samps, logqs = [], []
    for b in range(bs):
        idx = edge_index[b, nf:, :]                           # (dim, 3)
        X = jnp.ones((dim, nf), jnp.float32) / nf
        it = 0
        while it < max_iters:
            X_blk = X
            for _ in range(check_every):
                allfeat = jnp.concatenate([identity, X], axis=0)
                X = jnp.mean(allfeat[idx], axis=1)
            it += check_every
            if float(jnp.mean(jnp.abs(X - X_blk))) <= tol:
                break
        nfeat = jnp.concatenate([identity, X], axis=0)        # (nnodes, nf)
        pidx = edge_index[b, :-1, 0]
        child = nfeat[:-1, :]
        parent = nfeat[pidx]
        xin = jnp.concatenate([child, parent], axis=-1)
        h = elu(xin @ W1 + b1)
        h = elu(h @ W2 + b2)
        ms = h @ W3 + b3
        mean_, std_ = ms[:, 0], ms[:, 1]
        e = eps[b]
        samps.append(e * jnp.exp(std_) + mean_ - 2.0)
        logqs.append(jnp.sum(-0.5 * LOG_2PI - 0.5 * e ** 2) - jnp.sum(std_))
    return jnp.stack(samps), jnp.stack(logqs)


# ----------------------------------------------------------------------------
if __name__ == "__main__":
    ntips = 8
    hidden_dim = 32
    bs = 2
    nnodes = 2 * ntips - 2        # 14 nodes, 13 branches

    # Two valid unrooted 8-leaf trees (node nnodes-1 == 13 is the trifurcating root).
    # Each row: leaf -> [parent, -1, -1]; internal -> [parent, child, child];
    # root (last row) -> [child, child, child].
    tree_balanced = [
        [8, -1, -1], [8, -1, -1], [9, -1, -1], [9, -1, -1],
        [11, -1, -1], [11, -1, -1], [12, -1, -1], [12, -1, -1],
        [13, 0, 1], [13, 2, 3], [13, 11, 12], [10, 4, 5], [10, 6, 7],
        [8, 9, 10],
    ]
    tree_caterpillar = [
        [13, -1, -1], [13, -1, -1], [8, -1, -1], [9, -1, -1],
        [10, -1, -1], [11, -1, -1], [12, -1, -1], [12, -1, -1],
        [13, 2, 9], [8, 3, 10], [9, 4, 11], [10, 5, 12], [11, 6, 7],
        [0, 1, 8],
    ]
    edge_index = jnp.array([tree_balanced, tree_caterpillar], dtype=jnp.int32)

    key = jax.random.PRNGKey(0)
    kp, ke = jax.random.split(key)
    params = init_meanstd_params(kp, ntips, hidden_dim)
    # sample_branch_base noise: randn(bs, 2*ntips-3)
    eps = jax.random.normal(ke, (bs, 2 * ntips - 3), dtype=jnp.float32)

    samp, logq = gnn_branch_forward(edge_index, params, eps, ntips)
    samp, logq = jax.block_until_ready((samp, logq))

    samp_ref, logq_ref = reference_forward(edge_index, params, eps, ntips)
    assert samp.shape == (bs, 2 * ntips - 3) and logq.shape == (bs,)
    assert jnp.allclose(samp, samp_ref, atol=1e-4, rtol=1e-4), "samp mismatch"
    assert jnp.allclose(logq, logq_ref, atol=1e-4, rtol=1e-4), "logq mismatch"

    print("KERNEL_OK")
</pallas_src>

<mosaic_0001>
module attributes {stable_mosaic.version = 11 : i64} {
  func.func @_gnn_branch_kernel(%arg0: i32, %arg1: memref<1x3x6xi32, #tpu.memory_space<vmem>>, %arg2: memref<1x3x6xi32, #tpu.memory_space<vmem>>, %arg3: memref<1x1x128xi32, #tpu.memory_space<vmem>>, %arg4: memref<1x1x128xf32, #tpu.memory_space<vmem>>, %arg5: memref<32x16xf32, #tpu.memory_space<vmem>>, %arg6: memref<32x1xf32, #tpu.memory_space<vmem>>, %arg7: memref<32x32xf32, #tpu.memory_space<vmem>>, %arg8: memref<32x1xf32, #tpu.memory_space<vmem>>, %arg9: memref<32x2xf32, #tpu.memory_space<vmem>>, %arg10: memref<1x2xf32, #tpu.memory_space<vmem>>, %arg11: memref<1x1x128xf32, #tpu.memory_space<vmem>>, %arg12: memref<1x1x128xf32, #tpu.memory_space<vmem>>) attributes {dimension_semantics = [#tpu.dimension_semantics<parallel>], iteration_bounds = array<i64: 2>, scalar_prefetch = 0 : i64, scratch_operands = 0 : i64, tpu.core_type = #tpu.core_type<tc>, window_params = [{transform_indices = @transform_0, window_bounds = array<i64: 1, 3, 6>}, {transform_indices = @transform_1, window_bounds = array<i64: 1, 3, 6>}, {transform_indices = @transform_2, window_bounds = array<i64: 1, 1, 128>}, {transform_indices = @transform_3, window_bounds = array<i64: 1, 1, 128>}, {pipeline_mode = #tpu.pipeline_mode<synchronous>, transform_indices = @transform_4, window_bounds = array<i64: 32, 16>}, {pipeline_mode = #tpu.pipeline_mode<synchronous>, transform_indices = @transform_5, window_bounds = array<i64: 32, 1>}, {pipeline_mode = #tpu.pipeline_mode<synchronous>, transform_indices = @transform_6, window_bounds = array<i64: 32, 32>}, {pipeline_mode = #tpu.pipeline_mode<synchronous>, transform_indices = @transform_7, window_bounds = array<i64: 32, 1>}, {pipeline_mode = #tpu.pipeline_mode<synchronous>, transform_indices = @transform_8, window_bounds = array<i64: 32, 2>}, {pipeline_mode = #tpu.pipeline_mode<synchronous>, transform_indices = @transform_9, window_bounds = array<i64: 1, 2>}, {transform_indices = @transform_10, window_bounds = array<i64: 1, 1, 128>}, {transform_indices = @transform_11, window_bounds = array<i64: 1, 1, 128>}]} {
    %c0 = arith.constant 0 : index
    %c0_0 = arith.constant 0 : index
    %c0_1 = arith.constant 0 : index
    %0 = vector.load %arg1[%c0, %c0_0, %c0_1] : memref<1x3x6xi32, #tpu.memory_space<vmem>>, vector<1x3x6xi32>
    %1 = vector.shape_cast %0 : vector<1x3x6xi32> to vector<3x6xi32>
    %c0_2 = arith.constant 0 : index
    %c0_3 = arith.constant 0 : index
    %c0_4 = arith.constant 0 : index
    %2 = vector.load %arg2[%c0_2, %c0_3, %c0_4] : memref<1x3x6xi32, #tpu.memory_space<vmem>>, vector<1x3x6xi32>
    %3 = vector.shape_cast %2 : vector<1x3x6xi32> to vector<3x6xi32>
    %4 = tpu.iota {dimensions = array<i32: 0>} : vector<8x6xi32>
    %5 = tpu.iota {dimensions = array<i32: 0>} : vector<6x6xi32>
    %cst = arith.constant 0.000000e+00 : f32
    %6 = vector.broadcast %cst : f32 to vector<8x6xf32>
    %cst_5 = arith.constant 0.000000e+00 : f32
    %7 = vector.broadcast %cst_5 : f32 to vector<6x6xf32>
    %8 = vector.extract_strided_slice %1 {offsets = [0, 0], sizes = [1, 6], strides = [1, 1]} : vector<3x6xi32> to vector<1x6xi32>
    %9 = vector.broadcast %8 : vector<1x6xi32> to vector<8x6xi32>
    %10 = arith.cmpi eq, %9, %4 : vector<8x6xi32>
    %11 = arith.extui %10 : vector<8x6xi1> to vector<8x6xi32>
    %12 = arith.sitofp %11 : vector<8x6xi32> to vector<8x6xf32>
    %13 = arith.addf %6, %12 : vector<8x6xf32>
    %14 = vector.extract_strided_slice %3 {offsets = [0, 0], sizes = [1, 6], strides = [1, 1]} : vector<3x6xi32> to vector<1x6xi32>
    %15 = vector.broadcast %14 : vector<1x6xi32> to vector<6x6xi32>
    %16 = arith.cmpi eq, %15, %5 : vector<6x6xi32>
    %17 = arith.extui %16 : vector<6x6xi1> to vector<6x6xi32>
    %18 = arith.sitofp %17 : vector<6x6xi32> to vector<6x6xf32>
    %19 = arith.addf %7, %18 : vector<6x6xf32>
    %20 = vector.extract_strided_slice %1 {offsets = [1, 0], sizes = [1, 6], strides = [1, 1]} : vector<3x6xi32> to vector<1x6xi32>
    %21 = vector.broadcast %20 : vector<1x6xi32> to vector<8x6xi32>
    %22 = arith.cmpi eq, %21, %4 : vector<8x6xi32>
    %23 = arith.extui %22 : vector<8x6xi1> to vector<8x6xi32>
    %24 = arith.sitofp %23 : vector<8x6xi32> to vector<8x6xf32>
    %25 = arith.addf %13, %24 : vector<8x6xf32>
    %26 = vector.extract_strided_slice %3 {offsets = [1, 0], sizes = [1, 6], strides = [1, 1]} : vector<3x6xi32> to vector<1x6xi32>
    %27 = vector.broadcast %26 : vector<1x6xi32> to vector<6x6xi32>
    %28 = arith.cmpi eq, %27, %5 : vector<6x6xi32>
    %29 = arith.extui %28 : vector<6x6xi1> to vector<6x6xi32>
    %30 = arith.sitofp %29 : vector<6x6xi32> to vector<6x6xf32>
    %31 = arith.addf %19, %30 : vector<6x6xf32>
    %32 = vector.extract_strided_slice %1 {offsets = [2, 0], sizes = [1, 6], strides = [1, 1]} : vector<3x6xi32> to vector<1x6xi32>
    %33 = vector.broadcast %32 : vector<1x6xi32> to vector<8x6xi32>
    %34 = arith.cmpi eq, %33, %4 : vector<8x6xi32>
    %35 = arith.extui %34 : vector<8x6xi1> to vector<8x6xi32>
    %36 = arith.sitofp %35 : vector<8x6xi32> to vector<8x6xf32>
    %37 = arith.addf %25, %36 : vector<8x6xf32>
    %38 = vector.extract_strided_slice %3 {offsets = [2, 0], sizes = [1, 6], strides = [1, 1]} : vector<3x6xi32> to vector<1x6xi32>
    %39 = vector.broadcast %38 : vector<1x6xi32> to vector<6x6xi32>
    %40 = arith.cmpi eq, %39, %5 : vector<6x6xi32>
    %41 = arith.extui %40 : vector<6x6xi1> to vector<6x6xi32>
    %42 = arith.sitofp %41 : vector<6x6xi32> to vector<6x6xf32>
    %43 = arith.addf %31, %42 : vector<6x6xf32>
    %cst_6 = arith.constant 0.333333343 : f32
    %44 = vector.broadcast %cst_6 : f32 to vector<8x6xf32>
    %45 = arith.mulf %37, %44 : vector<8x6xf32>
    %cst_7 = arith.constant 0.333333343 : f32
    %46 = vector.broadcast %cst_7 : f32 to vector<6x6xf32>
    %47 = arith.mulf %43, %46 : vector<6x6xf32>
    %cst_8 = arith.constant dense<0.000000e+00> : vector<8x6xf32>
    %48 = tpu.matmul %45, %47, %cst_8 {dimension_numbers = #tpu.dot_dimension_numbers<[1], [0], [0], [1], [0, 0, 1, 1], [], []>} : vector<8x6xf32>, vector<6x6xf32>, vector<8x6xf32> -> vector<8x6xf32>
    %49 = arith.addf %45, %48 : vector<8x6xf32>
    %cst_9 = arith.constant dense<0.000000e+00> : vector<6x6xf32>
    %50 = tpu.matmul %47, %47, %cst_9 {dimension_numbers = #tpu.dot_dimension_numbers<[1], [0], [0], [1], [0, 0, 1, 1], [], []>} : vector<6x6xf32>, vector<6x6xf32>, vector<6x6xf32> -> vector<6x6xf32>
    %cst_10 = arith.constant dense<0.000000e+00> : vector<8x6xf32>
    %51 = tpu.matmul %49, %50, %cst_10 {dimension_numbers = #tpu.dot_dimension_numbers<[1], [0], [0], [1], [0, 0, 1, 1], [], []>} : vector<8x6xf32>, vector<6x6xf32>, vector<8x6xf32> -> vector<8x6xf32>
    %52 = arith.addf %49, %51 : vector<8x6xf32>
    %cst_11 = arith.constant dense<0.000000e+00> : vector<6x6xf32>
    %53 = tpu.matmul %50, %50, %cst_11 {dimension_numbers = #tpu.dot_dimension_numbers<[1], [0], [0], [1], [0, 0, 1, 1], [], []>} : vector<6x6xf32>, vector<6x6xf32>, vector<6x6xf32> -> vector<6x6xf32>
    %cst_12 = arith.constant dense<0.000000e+00> : vector<8x6xf32>
    %54 = tpu.matmul %52, %53, %cst_12 {dimension_numbers = #tpu.dot_dimension_numbers<[1], [0], [0], [1], [0, 0, 1, 1], [], []>} : vector<8x6xf32>, vector<6x6xf32>, vector<8x6xf32> -> vector<8x6xf32>
    %55 = arith.addf %52, %54 : vector<8x6xf32>
    %cst_13 = arith.constant dense<0.000000e+00> : vector<6x6xf32>
    %56 = tpu.matmul %53, %53, %cst_13 {dimension_numbers = #tpu.dot_dimension_numbers<[1], [0], [0], [1], [0, 0, 1, 1], [], []>} : vector<6x6xf32>, vector<6x6xf32>, vector<6x6xf32> -> vector<6x6xf32>
    %cst_14 = arith.constant 1.250000e-01 : f32
    %57 = vector.broadcast %cst_14 : f32 to vector<8x6xf32>
    %cst_15 = arith.constant 0.020833334 : f32
    %c0_i32 = arith.constant 0 : i32
    %cst_16 = arith.constant 0x7F800000 : f32
    %58:3 = scf.while (%arg13 = %57, %arg14 = %c0_i32, %arg15 = %cst_16) : (vector<8x6xf32>, i32, f32) -> (vector<8x6xf32>, i32, f32) {
      %c10000_i32 = arith.constant 10000 : i32
      %165 = arith.cmpi slt, %arg14, %c10000_i32 : i32
      %cst_60 = arith.constant 9.99999974E-6 : f32
      %166 = arith.cmpf ogt, %arg15, %cst_60 : f32
      %167 = arith.andi %165, %166 : i1
      scf.condition(%167) %arg13, %arg14, %arg15 : vector<8x6xf32>, i32, f32
    } do {
    ^bb0(%arg13: vector<8x6xf32>, %arg14: i32, %arg15: f32):
      %cst_60 = arith.constant dense<0.000000e+00> : vector<8x6xf32>
      %165 = tpu.matmul %arg13, %56, %cst_60 {dimension_numbers = #tpu.dot_dimension_numbers<[1], [0], [0], [1], [0, 0, 1, 1], [], []>} : vector<8x6xf32>, vector<6x6xf32>, vector<8x6xf32> -> vector<8x6xf32>
      %166 = arith.addf %55, %165 : vector<8x6xf32>
      %167 = arith.subf %166, %arg13 : vector<8x6xf32>
      %168 = math.absf %167 : vector<8x6xf32>
      %169 = vector.shape_cast %168 : vector<8x6xf32> to vector<1x8x6xf32>
      %cst_61 = arith.constant dense<0.000000e+00> : vector<1xf32>
      %170 = vector.multi_reduction <add>, %169, %cst_61 [1, 2] : vector<1x8x6xf32> to vector<1xf32>
      %171 = vector.shape_cast %170 : vector<1xf32> to vector<1x1x1xf32>
      %172 = vector.extract %171[0, 0, 0] : f32 from vector<1x1x1xf32>
      %173 = arith.mulf %172, %cst_15 : f32
      %c8_i32_62 = arith.constant 8 : i32
      %174 = arith.addi %arg14, %c8_i32_62 : i32
      scf.yield %166, %174, %173 : vector<8x6xf32>, i32, f32
    }
    %59 = tpu.iota {dimensions = array<i32: 0>} : vector<8x128xi32>
    %60 = tpu.iota {dimensions = array<i32: 1>} : vector<8x128xi32>
    %61 = tpu.iota {dimensions = array<i32: 0>} : vector<6x128xi32>
    %62 = tpu.iota {dimensions = array<i32: 1>} : vector<6x128xi32>
    %c0_17 = arith.constant 0 : index
    %c0_18 = arith.constant 0 : index
    %c0_19 = arith.constant 0 : index
    %63 = vector.load %arg3[%c0_17, %c0_18, %c0_19] : memref<1x1x128xi32, #tpu.memory_space<vmem>>, vector<1x1x128xi32>
    %64 = vector.shape_cast %63 : vector<1x1x128xi32> to vector<1x128xi32>
    %65 = arith.cmpi eq, %60, %59 : vector<8x128xi32>
    %66 = arith.extui %65 : vector<8x128xi1> to vector<8x128xi32>
    %67 = arith.sitofp %66 : vector<8x128xi32> to vector<8x128xf32>
    %c8_i32 = arith.constant 8 : i32
    %68 = vector.broadcast %c8_i32 : i32 to vector<6x128xi32>
    %69 = arith.subi %62, %68 : vector<6x128xi32>
    %70 = arith.cmpi eq, %69, %61 : vector<6x128xi32>
    %c13_i32 = arith.constant 13 : i32
    %71 = vector.broadcast %c13_i32 : i32 to vector<6x128xi32>
    %72 = arith.cmpi slt, %62, %71 : vector<6x128xi32>
    %73 = arith.andi %70, %72 : vector<6x128xi1>
    %74 = arith.extui %73 : vector<6x128xi1> to vector<6x128xi32>
    %75 = arith.sitofp %74 : vector<6x128xi32> to vector<6x128xf32>
    %76 = vector.broadcast %64 : vector<1x128xi32> to vector<8x128xi32>
    %77 = arith.cmpi eq, %76, %59 : vector<8x128xi32>
    %78 = arith.extui %77 : vector<8x128xi1> to vector<8x128xi32>
    %79 = arith.sitofp %78 : vector<8x128xi32> to vector<8x128xf32>
    %c8_i32_20 = arith.constant 8 : i32
    %80 = vector.broadcast %c8_i32_20 : i32 to vector<1x128xi32>
    %81 = arith.subi %64, %80 : vector<1x128xi32>
    %82 = vector.broadcast %81 : vector<1x128xi32> to vector<6x128xi32>
    %83 = arith.cmpi eq, %82, %61 : vector<6x128xi32>
    %84 = arith.extui %83 : vector<6x128xi1> to vector<6x128xi32>
    %85 = arith.sitofp %84 : vector<6x128xi32> to vector<6x128xf32>
    %cst_21 = arith.constant dense<0.000000e+00> : vector<8x128xf32>
    %86 = tpu.matmul %58#0, %75, %cst_21 {dimension_numbers = #tpu.dot_dimension_numbers<[1], [0], [0], [1], [0, 0, 1, 1], [], []>} : vector<8x6xf32>, vector<6x128xf32>, vector<8x128xf32> -> vector<8x128xf32>
    %87 = arith.addf %67, %86 : vector<8x128xf32>
    %cst_22 = arith.constant dense<0.000000e+00> : vector<8x128xf32>
    %88 = tpu.matmul %58#0, %85, %cst_22 {dimension_numbers = #tpu.dot_dimension_numbers<[1], [0], [0], [1], [0, 0, 1, 1], [], []>} : vector<8x6xf32>, vector<6x128xf32>, vector<8x128xf32> -> vector<8x128xf32>
    %89 = arith.addf %79, %88 : vector<8x128xf32>
    %90 = tpu.concatenate %87, %89 in 0 : vector<8x128xf32>, vector<8x128xf32> -> vector<16x128xf32>
    %c0_23 = arith.constant 0 : index
    %c0_24 = arith.constant 0 : index
    %91 = vector.load %arg5[%c0_23, %c0_24] : memref<32x16xf32, #tpu.memory_space<vmem>>, vector<32x16xf32>
    %cst_25 = arith.constant dense<0.000000e+00> : vector<32x128xf32>
    %92 = tpu.matmul %91, %90, %cst_25 {dimension_numbers = #tpu.dot_dimension_numbers<[1], [0], [0], [1], [0, 0, 1, 1], [], []>} : vector<32x16xf32>, vector<16x128xf32>, vector<32x128xf32> -> vector<32x128xf32>
    %c0_26 = arith.constant 0 : index
    %c0_27 = arith.constant 0 : index
    %93 = vector.load %arg6[%c0_26, %c0_27] : memref<32x1xf32, #tpu.memory_space<vmem>>, vector<32x1xf32>
    %94 = vector.broadcast %93 : vector<32x1xf32> to vector<32x128xf32>
    %95 = arith.addf %92, %94 : vector<32x128xf32>
    %cst_28 = arith.constant 0.000000e+00 : f32
    %96 = vector.broadcast %cst_28 : f32 to vector<32x128xf32>
    %97 = arith.cmpf ogt, %95, %96 : vector<32x128xf32>
    %cst_29 = arith.constant 0.000000e+00 : f32
    %98 = vector.broadcast %cst_29 : f32 to vector<32x128xf32>
    %99 = arith.minimumf %95, %98 : vector<32x128xf32>
    %100 = math.exp %99 : vector<32x128xf32>
    %cst_30 = arith.constant 1.000000e+00 : f32
    %101 = vector.broadcast %cst_30 : f32 to vector<32x128xf32>
    %102 = arith.subf %100, %101 : vector<32x128xf32>
    %103 = arith.select %97, %95, %102 : vector<32x128xi1>, vector<32x128xf32>
    %c0_31 = arith.constant 0 : index
    %c0_32 = arith.constant 0 : index
    %104 = vector.load %arg7[%c0_31, %c0_32] : memref<32x32xf32, #tpu.memory_space<vmem>>, vector<32x32xf32>
    %cst_33 = arith.constant dense<0.000000e+00> : vector<32x128xf32>
    %105 = tpu.matmul %104, %103, %cst_33 {dimension_numbers = #tpu.dot_dimension_numbers<[1], [0], [0], [1], [0, 0, 1, 1], [], []>} : vector<32x32xf32>, vector<32x128xf32>, vector<32x128xf32> -> vector<32x128xf32>
    %c0_34 = arith.constant 0 : index
    %c0_35 = arith.constant 0 : index
    %106 = vector.load %arg8[%c0_34, %c0_35] : memref<32x1xf32, #tpu.memory_space<vmem>>, vector<32x1xf32>
    %107 = vector.broadcast %106 : vector<32x1xf32> to vector<32x128xf32>
    %108 = arith.addf %105, %107 : vector<32x128xf32>
    %cst_36 = arith.constant 0.000000e+00 : f32
    %109 = vector.broadcast %cst_36 : f32 to vector<32x128xf32>
    %110 = arith.cmpf ogt, %108, %109 : vector<32x128xf32>
    %cst_37 = arith.constant 0.000000e+00 : f32
    %111 = vector.broadcast %cst_37 : f32 to vector<32x128xf32>
    %112 = arith.minimumf %108, %111 : vector<32x128xf32>
    %113 = math.exp %112 : vector<32x128xf32>
    %cst_38 = arith.constant 1.000000e+00 : f32
    %114 = vector.broadcast %cst_38 : f32 to vector<32x128xf32>
    %115 = arith.subf %113, %114 : vector<32x128xf32>
    %116 = arith.select %110, %108, %115 : vector<32x128xi1>, vector<32x128xf32>
    %c0_39 = arith.constant 0 : index
    %c0_40 = arith.constant 0 : index
    %117 = vector.load %arg9[%c0_39, %c0_40] : memref<32x2xf32, #tpu.memory_space<vmem>>, vector<32x2xf32>
    %c0_41 = arith.constant 0 : index
    %c0_42 = arith.constant 0 : index
    %118 = vector.load %arg10[%c0_41, %c0_42] : memref<1x2xf32, #tpu.memory_space<vmem>>, vector<1x2xf32>
    %119 = vector.extract_strided_slice %117 {offsets = [0, 0], sizes = [32, 1], strides = [1, 1]} : vector<32x2xf32> to vector<32x1xf32>
    %120 = vector.broadcast %119 : vector<32x1xf32> to vector<32x128xf32>
    %121 = arith.mulf %116, %120 : vector<32x128xf32>
    %cst_43 = arith.constant dense<0.000000e+00> : vector<128xf32>
    %122 = vector.multi_reduction <add>, %121, %cst_43 [0] : vector<32x128xf32> to vector<128xf32>
    %123 = vector.shape_cast %122 : vector<128xf32> to vector<1x128xf32>
    %124 = vector.extract_strided_slice %118 {offsets = [0, 0], sizes = [1, 1], strides = [1, 1]} : vector<1x2xf32> to vector<1x1xf32>
    %125 = vector.broadcast %124 : vector<1x1xf32> to vector<1x128xf32>
    %126 = arith.addf %123, %125 : vector<1x128xf32>
    %127 = vector.extract_strided_slice %117 {offsets = [0, 1], sizes = [32, 1], strides = [1, 1]} : vector<32x2xf32> to vector<32x1xf32>
    %128 = vector.broadcast %127 : vector<32x1xf32> to vector<32x128xf32>
    %129 = arith.mulf %116, %128 : vector<32x128xf32>
    %cst_44 = arith.constant dense<0.000000e+00> : vector<128xf32>
    %130 = vector.multi_reduction <add>, %129, %cst_44 [0] : vector<32x128xf32> to vector<128xf32>
    %131 = vector.shape_cast %130 : vector<128xf32> to vector<1x128xf32>
    %132 = vector.extract_strided_slice %118 {offsets = [0, 1], sizes = [1, 1], strides = [1, 1]} : vector<1x2xf32> to vector<1x1xf32>
    %133 = vector.broadcast %132 : vector<1x1xf32> to vector<1x128xf32>
    %134 = arith.addf %131, %133 : vector<1x128xf32>
    %c0_45 = arith.constant 0 : index
    %c0_46 = arith.constant 0 : index
    %c0_47 = arith.constant 0 : index
    %135 = vector.load %arg4[%c0_45, %c0_46, %c0_47] : memref<1x1x128xf32, #tpu.memory_space<vmem>>, vector<1x1x128xf32>
    %136 = vector.shape_cast %135 : vector<1x1x128xf32> to vector<1x128xf32>
    %137 = math.exp %134 : vector<1x128xf32>
    %138 = arith.mulf %136, %137 : vector<1x128xf32>
    %139 = arith.addf %138, %126 : vector<1x128xf32>
    %cst_48 = arith.constant 2.000000e+00 : f32
    %140 = vector.broadcast %cst_48 : f32 to vector<1x128xf32>
    %141 = arith.subf %139, %140 : vector<1x128xf32>
    %c0_49 = arith.constant 0 : index
    %c0_50 = arith.constant 0 : index
    %c0_51 = arith.constant 0 : index
    %142 = vector.load %arg11[%c0_49, %c0_50, %c0_51] : memref<1x1x128xf32, #tpu.memory_space<vmem>>, vector<1x1x128xf32>
    %143 = vector.shape_cast %142 : vector<1x1x128xf32> to vector<1x128xf32>
    %144 = vector.shape_cast %141 : vector<1x128xf32> to vector<1x1x128xf32>
    tpu.vector_store %arg11[%c0_49, %c0_50, %c0_51], %144 {strides = array<i32>} : memref<1x1x128xf32, #tpu.memory_space<vmem>>, vector<1x1x128xf32>,
    %145 = tpu.iota {dimensions = array<i32: 1>} : vector<1x128xi32>
    %c13_i32_52 = arith.constant 13 : i32
    %146 = vector.broadcast %c13_i32_52 : i32 to vector<1x128xi32>
    %147 = arith.cmpi slt, %145, %146 : vector<1x128xi32>
    %148 = arith.extui %147 : vector<1x128xi1> to vector<1x128xi32>
    %149 = arith.sitofp %148 : vector<1x128xi32> to vector<1x128xf32>
    %cst_53 = arith.constant 5.000000e-01 : f32
    %150 = vector.broadcast %cst_53 : f32 to vector<1x128xf32>
    %151 = arith.mulf %150, %136 : vector<1x128xf32>
    %152 = arith.mulf %151, %136 : vector<1x128xf32>
    %cst_54 = arith.constant -0.918938517 : f32
    %153 = vector.broadcast %cst_54 : f32 to vector<1x128xf32>
    %154 = arith.subf %153, %152 : vector<1x128xf32>
    %155 = arith.subf %154, %134 : vector<1x128xf32>
    %156 = arith.mulf %155, %149 : vector<1x128xf32>
    %cst_55 = arith.constant dense<0.000000e+00> : vector<1xf32>
    %157 = vector.multi_reduction <add>, %156, %cst_55 [1] : vector<1x128xf32> to vector<1xf32>
    %158 = vector.shape_cast %157 : vector<1xf32> to vector<1x1xf32>
    %cst_56 = arith.constant 0.000000e+00 : f32
    %159 = vector.broadcast %cst_56 : f32 to vector<1x128xf32>
    %160 = vector.broadcast %158 : vector<1x1xf32> to vector<1x128xf32>
    %161 = arith.addf %160, %159 : vector<1x128xf32>
    %c0_57 = arith.constant 0 : index
    %c0_58 = arith.constant 0 : index
    %c0_59 = arith.constant 0 : index
    %162 = vector.load %arg12[%c0_57, %c0_58, %c0_59] : memref<1x1x128xf32, #tpu.memory_space<vmem>>, vector<1x1x128xf32>
    %163 = vector.shape_cast %162 : vector<1x1x128xf32> to vector<1x128xf32>
    %164 = vector.shape_cast %161 : vector<1x128xf32> to vector<1x1x128xf32>
    tpu.vector_store %arg12[%c0_57, %c0_58, %c0_59], %164 {strides = array<i32>} : memref<1x1x128xf32, #tpu.memory_space<vmem>>, vector<1x1x128xf32>,
    return
  }
  func.func @transform_0(%arg0: i32) -> (i32, i32, i32) {
    %c0_i32 = arith.constant 0 : i32
    %c0_i32_0 = arith.constant 0 : i32
    %c0_i32_1 = arith.constant 0 : i32
    return %arg0, %c0_i32, %c0_i32_0 : i32, i32, i32
  }
  func.func @transform_1(%arg0: i32) -> (i32, i32, i32) {
    %c0_i32 = arith.constant 0 : i32
    %c0_i32_0 = arith.constant 0 : i32
    %c0_i32_1 = arith.constant 0 : i32
    return %arg0, %c0_i32, %c0_i32_0 : i32, i32, i32
  }
  func.func @transform_2(%arg0: i32) -> (i32, i32, i32) {
    %c0_i32 = arith.constant 0 : i32
    %c0_i32_0 = arith.constant 0 : i32
    %c0_i32_1 = arith.constant 0 : i32
    return %arg0, %c0_i32, %c0_i32_0 : i32, i32, i32
  }
  func.func @transform_3(%arg0: i32) -> (i32, i32, i32) {
    %c0_i32 = arith.constant 0 : i32
    %c0_i32_0 = arith.constant 0 : i32
    %c0_i32_1 = arith.constant 0 : i32
    return %arg0, %c0_i32, %c0_i32_0 : i32, i32, i32
  }
  func.func @transform_4(%arg0: i32) -> (i32, i32) {
    %c0_i32 = arith.constant 0 : i32
    %c0_i32_0 = arith.constant 0 : i32
    %c0_i32_1 = arith.constant 0 : i32
    return %c0_i32, %c0_i32_0 : i32, i32
  }
  func.func @transform_5(%arg0: i32) -> (i32, i32) {
    %c0_i32 = arith.constant 0 : i32
    %c0_i32_0 = arith.constant 0 : i32
    %c0_i32_1 = arith.constant 0 : i32
    return %c0_i32, %c0_i32_0 : i32, i32
  }
  func.func @transform_6(%arg0: i32) -> (i32, i32) {
    %c0_i32 = arith.constant 0 : i32
    %c0_i32_0 = arith.constant 0 : i32
    %c0_i32_1 = arith.constant 0 : i32
    return %c0_i32, %c0_i32_0 : i32, i32
  }
  func.func @transform_7(%arg0: i32) -> (i32, i32) {
    %c0_i32 = arith.constant 0 : i32
    %c0_i32_0 = arith.constant 0 : i32
    %c0_i32_1 = arith.constant 0 : i32
    return %c0_i32, %c0_i32_0 : i32, i32
  }
  func.func @transform_8(%arg0: i32) -> (i32, i32) {
    %c0_i32 = arith.constant 0 : i32
    %c0_i32_0 = arith.constant 0 : i32
    %c0_i32_1 = arith.constant 0 : i32
    return %c0_i32, %c0_i32_0 : i32, i32
  }
  func.func @transform_9(%arg0: i32) -> (i32, i32) {
    %c0_i32 = arith.constant 0 : i32
    %c0_i32_0 = arith.constant 0 : i32
    %c0_i32_1 = arith.constant 0 : i32
    return %c0_i32, %c0_i32_0 : i32, i32
  }
  func.func @transform_10(%arg0: i32) -> (i32, i32, i32) {
    %c0_i32 = arith.constant 0 : i32
    %c0_i32_0 = arith.constant 0 : i32
    %c0_i32_1 = arith.constant 0 : i32
    return %arg0, %c0_i32, %c0_i32_0 : i32, i32, i32
  }
  func.func @transform_11(%arg0: i32) -> (i32, i32, i32) {
    %c0_i32 = arith.constant 0 : i32
    %c0_i32_0 = arith.constant 0 : i32
    %c0_i32_1 = arith.constant 0 : i32
    return %arg0, %c0_i32, %c0_i32_0 : i32, i32, i32
  }
}

</mosaic_0001>

<llo_original>
// kernel: tpu_custom_call.1
$region0: #{tpu_custom_call.1}
  #allocation0 [shape = 'u32[]', space=smem, size = 0x4, offset = 0x4, fixed_abs, tag = 'smem constant byte address 0x4 - core index']
  #allocation1 [shape = 'u32[72,128]{1,0:T(1,128)}', space=vmem, size = 0x9000, scoped, tag = 'internal scratch']
  %s0 = inlined_call_operand.vmem [shape: s32[2,3,6], index: 0, kind: input, shape index: {}]
  %s1 = inlined_call_operand.vmem [shape: s32[2,3,6], index: 1, kind: input, shape index: {}]
  %s2 = inlined_call_operand.vmem [shape: s32[2,1,128], index: 2, kind: input, shape index: {}]
  %s3 = inlined_call_operand.vmem [shape: f32[2,1,128], index: 3, kind: input, shape index: {}]
  %s4 = inlined_call_operand.vmem [shape: f32[32,16], index: 4, kind: input, shape index: {}]
  %s5 = inlined_call_operand.vmem [shape: f32[32,1], index: 5, kind: input, shape index: {}]
  %s6 = inlined_call_operand.vmem [shape: f32[32,32], index: 6, kind: input, shape index: {}]
  %s7 = inlined_call_operand.vmem [shape: f32[32,1], index: 7, kind: input, shape index: {}]
  %s8 = inlined_call_operand.vmem [shape: f32[32,2], index: 8, kind: input, shape index: {}]
  %s9 = inlined_call_operand.vmem [shape: f32[1,2], index: 9, kind: input, shape index: {}]
  %s10 = inlined_call_operand.hbm [shape: f32[2,1,128], index: 10, kind: output, shape index: {0}]
  %s11 = inlined_call_operand.hbm [shape: f32[2,1,128], index: 11, kind: output, shape index: {1}]
  %12 = xla_tuple %s10, %s11
  %s13 = sld [smem:[#allocation0]]
  $region88: #{tpu_custom_call.1} parent=0
    _
  %s15 = ssub.s32 1, %s13
  %s16 = scalar_select 0, %s15, %s13
  $region1: #{tpu_custom_call.1} parent=0
    #allocation2 [shape = 'u8[1024]{0}', space=vmem, size = 0x400, scoped, tag = 'output window, operand 0']
    #allocation3 [shape = 's32[2]{0}', space=sflag, size = 0x8, scoped, tag = 'scoped memory for tpu_custom_call.1']
    #allocation4 [shape = 'u8[1024]{0}', space=vmem, size = 0x400, scoped, tag = 'output window, operand 1']
    #allocation5 [shape = 's32[2]{0}', space=sflag, size = 0x8, scoped, tag = 'scoped memory for tpu_custom_call.1']
    %17 = vsyncpa [#allocation3], 0
    %s18 = scalar_lea.sflag [#allocation3], 1
    %19 = vsyncpa %s18, 0
    %20 = vsyncpa [#allocation5], 0
    %s21 = scalar_lea.sflag [#allocation5], 1
    %22 = vsyncpa %s21, 0
    loop: start=0, step=1, limit=4
    $region2: #{tpu_custom_call.1} parent=1 // loop_pre_header
      _
    $region3: #{tpu_custom_call.1} parent=1 // loop_header
      %s24 = sphi 0, %s28
      %p25 = scmp.ge.s32.totalorder %s24, 4
      %s34 = sphi 0, %s36
      %s37 = sphi 0, %s34
      %s38 = sphi 0, %s37
      %s54 = sphi 0, %s38
      %s60 = sphi 0, %s62
      %s63 = sphi 0, %s60
      %s64 = sphi 0, %s63
      %s80 = sphi 0, %s64
      %s86 = sphi 0, %s88
      %s89 = sphi 0, %s86
      %s90 = sphi 0, %s89
      %s106 = sphi 0, %s90
      %s112 = sphi 0, %s114
      %s115 = sphi 0, %s112
      %s116 = sphi 0, %s115
      %s132 = sphi 0, %s116
      %s136 = sphi 0, %s136
      %s138 = sphi 0, %s136
      %s139 = sphi 0, %s138
      %s153 = sphi 0, %s139
      %s157 = sphi 0, %s157
      %s159 = sphi 0, %s157
      %s160 = sphi 0, %s159
      %s174 = sphi 0, %s160
      %s178 = sphi 0, %s178
      %s180 = sphi 0, %s178
      %s181 = sphi 0, %s180
      %s195 = sphi 0, %s181
      %s199 = sphi 0, %s199
      %s201 = sphi 0, %s199
      %s202 = sphi 0, %s201
      %s216 = sphi 0, %s202
      %s220 = sphi 0, %s220
      %s222 = sphi 0, %s220
      %s223 = sphi 0, %s222
      %s237 = sphi 0, %s223
      %s241 = sphi 0, %s241
      %s243 = sphi 0, %s241
      %s244 = sphi 0, %s243
      %s258 = sphi 0, %s244
      %s264 = sphi 0, %s266
      %s267 = sphi 0, %s264
      %s268 = sphi 0, %s267
      %s284 = sphi 0, %s268
      %s290 = sphi 0, %s292
      %s293 = sphi 0, %s290
      %s294 = sphi 0, %s293
      %s310 = sphi 0, %s294
    $region4: #{tpu_custom_call.1} parent=1 // loop_header_branch
      %27 = sbr.rel (%p25) target = $region8
    $region5: #{tpu_custom_call.1} parent=1 // loop_body
      %s29 = ssub.s32 %s24, 1
      %s30 = ssub.s32 %s24, 2
      %s31 = sadd.s32 %s24, 1
      %s32 = ssub.s32 %s24, %s31
      %p33 = scmp.eq.s32.totalorder %s32, 0
      %s35 = sadd.s32 %s34, 1
      %s36 = scalar_select %p33, %s34, %s35
      %p39 = pneg %p33
      %p40 = scmp.eq.s32.totalorder %s24, 1
      %p41 = por %p39, %p40
      %p42 = scmp.ne.s32.totalorder %s34, %s37
      %p43 = scmp.eq.s32.totalorder %s24, 0
      %p44 = por %p42, %p43
      %p45 = scmp.ne.s32.totalorder %s34, %s37
      %p46 = scmp.eq.s32.totalorder %s29, 1
      %p47 = por %p45, %p46
      %p48 = scmp.ne.s32.totalorder %s37, %s38
      %p49 = scmp.eq.s32.totalorder %s29, 0
      %p50 = por %p48, %p49
      %p51 = scmp.ne.s32.totalorder %s37, %s38
      %p52 = scmp.eq.s32.totalorder %s30, 1
      %p53 = por %p51, %p52
      %p55 = scmp.ne.s32.totalorder %s38, %s54
      %p56 = scmp.eq.s32.totalorder %s30, 0
      %p57 = por %p55, %p56
      %s58 = ssub.s32 %s24, %s31
      %p59 = scmp.eq.s32.totalorder %s58, 0
      %s61 = sadd.s32 %s60, 1
      %s62 = scalar_select %p59, %s60, %s61
      %p65 = pneg %p59
      %p66 = scmp.eq.s32.totalorder %s24, 1
      %p67 = por %p65, %p66
      %p68 = scmp.ne.s32.totalorder %s60, %s63
      %p69 = scmp.eq.s32.totalorder %s24, 0
      %p70 = por %p68, %p69
      %p71 = scmp.ne.s32.totalorder %s60, %s63
      %p72 = scmp.eq.s32.totalorder %s29, 1
      %p73 = por %p71, %p72
      %p74 = scmp.ne.s32.totalorder %s63, %s64
      %p75 = scmp.eq.s32.totalorder %s29, 0
      %p76 = por %p74, %p75
      %p77 = scmp.ne.s32.totalorder %s63, %s64
      %p78 = scmp.eq.s32.totalorder %s30, 1
      %p79 = por %p77, %p78
      %p81 = scmp.ne.s32.totalorder %s64, %s80
      %p82 = scmp.eq.s32.totalorder %s30, 0
      %p83 = por %p81, %p82
      %s84 = ssub.s32 %s24, %s31
      %p85 = scmp.eq.s32.totalorder %s84, 0
      %s87 = sadd.s32 %s86, 1
      %s88 = scalar_select %p85, %s86, %s87
      %p91 = pneg %p85
      %p92 = scmp.eq.s32.totalorder %s24, 1
      %p93 = por %p91, %p92
      %p94 = scmp.ne.s32.totalorder %s86, %s89
      %p95 = scmp.eq.s32.totalorder %s24, 0
      %p96 = por %p94, %p95
      %p97 = scmp.ne.s32.totalorder %s86, %s89
      %p98 = scmp.eq.s32.totalorder %s29, 1
      %p99 = por %p97, %p98
      %p100 = scmp.ne.s32.totalorder %s89, %s90
      %p101 = scmp.eq.s32.totalorder %s29, 0
      %p102 = por %p100, %p101
      %p103 = scmp.ne.s32.totalorder %s89, %s90
      %p104 = scmp.eq.s32.totalorder %s30, 1
      %p105 = por %p103, %p104
      %p107 = scmp.ne.s32.totalorder %s90, %s106
      %p108 = scmp.eq.s32.totalorder %s30, 0
      %p109 = por %p107, %p108
      %s110 = ssub.s32 %s24, %s31
      %p111 = scmp.eq.s32.totalorder %s110, 0
      %s113 = sadd.s32 %s112, 1
      %s114 = scalar_select %p111, %s112, %s113
      %p117 = pneg %p111
      %p118 = scmp.eq.s32.totalorder %s24, 1
      %p119 = por %p117, %p118
      %p120 = scmp.ne.s32.totalorder %s112, %s115
      %p121 = scmp.eq.s32.totalorder %s24, 0
      %p122 = por %p120, %p121
      %p123 = scmp.ne.s32.totalorder %s112, %s115
      %p124 = scmp.eq.s32.totalorder %s29, 1
      %p125 = por %p123, %p124
      %p126 = scmp.ne.s32.totalorder %s115, %s116
      %p127 = scmp.eq.s32.totalorder %s29, 0
      %p128 = por %p126, %p127
      %p129 = scmp.ne.s32.totalorder %s115, %s116
      %p130 = scmp.eq.s32.totalorder %s30, 1
      %p131 = por %p129, %p130
      %p133 = scmp.ne.s32.totalorder %s116, %s132
      %p134 = scmp.eq.s32.totalorder %s30, 0
      %p135 = por %p133, %p134
      %s137 = sadd.s32 %s136, 1
      %p140 = scmp.eq.s32.totalorder %s24, 1
      %p141 = scmp.ne.s32.totalorder %s136, %s138
      %p142 = scmp.eq.s32.totalorder %s24, 0
      %p143 = por %p141, %p142
      %p144 = scmp.ne.s32.totalorder %s136, %s138
      %p145 = scmp.eq.s32.totalorder %s29, 1
      %p146 = por %p144, %p145
      %p147 = scmp.ne.s32.totalorder %s138, %s139
      %p148 = scmp.eq.s32.totalorder %s29, 0
      %p149 = por %p147, %p148
      %p150 = scmp.ne.s32.totalorder %s138, %s139
      %p151 = scmp.eq.s32.totalorder %s30, 1
      %p152 = por %p150, %p151
      %p154 = scmp.ne.s32.totalorder %s139, %s153
      %p155 = scmp.eq.s32.totalorder %s30, 0
      %p156 = por %p154, %p155
      %s158 = sadd.s32 %s157, 1
      %p161 = scmp.eq.s32.totalorder %s24, 1
      %p162 = scmp.ne.s32.totalorder %s157, %s159
      %p163 = scmp.eq.s32.totalorder %s24, 0
      %p164 = por %p162, %p163
      %p165 = scmp.ne.s32.totalorder %s157, %s159
      %p166 = scmp.eq.s32.totalorder %s29, 1
      %p167 = por %p165, %p166
      %p168 = scmp.ne.s32.totalorder %s159, %s160
      %p169 = scmp.eq.s32.totalorder %s29, 0
      %p170 = por %p168, %p169
      %p171 = scmp.ne.s32.totalorder %s159, %s160
      %p172 = scmp.eq.s32.totalorder %s30, 1
      %p173 = por %p171, %p172
      %p175 = scmp.ne.s32.totalorder %s160, %s174
      %p176 = scmp.eq.s32.totalorder %s30, 0
      %p177 = por %p175, %p176
      %s179 = sadd.s32 %s178, 1
      %p182 = scmp.eq.s32.totalorder %s24, 1
      %p183 = scmp.ne.s32.totalorder %s178, %s180
      %p184 = scmp.eq.s32.totalorder %s24, 0
      %p185 = por %p183, %p184
      %p186 = scmp.ne.s32.totalorder %s178, %s180
      %p187 = scmp.eq.s32.totalorder %s29, 1
      %p188 = por %p186, %p187
      %p189 = scmp.ne.s32.totalorder %s180, %s181
      %p190 = scmp.eq.s32.totalorder %s29, 0
      %p191 = por %p189, %p190
      %p192 = scmp.ne.s32.totalorder %s180, %s181
      %p193 = scmp.eq.s32.totalorder %s30, 1
      %p194 = por %p192, %p193
      %p196 = scmp.ne.s32.totalorder %s181, %s195
      %p197 = scmp.eq.s32.totalorder %s30, 0
      %p198 = por %p196, %p197
      %s200 = sadd.s32 %s199, 1
      %p203 = scmp.eq.s32.totalorder %s24, 1
      %p204 = scmp.ne.s32.totalorder %s199, %s201
      %p205 = scmp.eq.s32.totalorder %s24, 0
      %p206 = por %p204, %p205
      %p207 = scmp.ne.s32.totalorder %s199, %s201
      %p208 = scmp.eq.s32.totalorder %s29, 1
      %p209 = por %p207, %p208
      %p210 = scmp.ne.s32.totalorder %s201, %s202
      %p211 = scmp.eq.s32.totalorder %s29, 0
      %p212 = por %p210, %p211
      %p213 = scmp.ne.s32.totalorder %s201, %s202
      %p214 = scmp.eq.s32.totalorder %s30, 1
      %p215 = por %p213, %p214
      %p217 = scmp.ne.s32.totalorder %s202, %s216
      %p218 = scmp.eq.s32.totalorder %s30, 0
      %p219 = por %p217, %p218
      %s221 = sadd.s32 %s220, 1
      %p224 = scmp.eq.s32.totalorder %s24, 1
      %p225 = scmp.ne.s32.totalorder %s220, %s222
      %p226 = scmp.eq.s32.totalorder %s24, 0
      %p227 = por %p225, %p226
      %p228 = scmp.ne.s32.totalorder %s220, %s222
      %p229 = scmp.eq.s32.totalorder %s29, 1
      %p230 = por %p228, %p229
      %p231 = scmp.ne.s32.totalorder %s222, %s223
      %p232 = scmp.eq.s32.totalorder %s29, 0
      %p233 = por %p231, %p232
      %p234 = scmp.ne.s32.totalorder %s222, %s223
      %p235 = scmp.eq.s32.totalorder %s30, 1
      %p236 = por %p234, %p235
      %p238 = scmp.ne.s32.totalorder %s223, %s237
      %p239 = scmp.eq.s32.totalorder %s30, 0
      %p240 = por %p238, %p239
      %s242 = sadd.s32 %s241, 1
      %p245 = scmp.eq.s32.totalorder %s24, 1
      %p246 = scmp.ne.s32.totalorder %s241, %s243
      %p247 = scmp.eq.s32.totalorder %s24, 0
      %p248 = por %p246, %p247
      %p249 = scmp.ne.s32.totalorder %s241, %s243
      %p250 = scmp.eq.s32.totalorder %s29, 1
      %p251 = por %p249, %p250
      %p252 = scmp.ne.s32.totalorder %s243, %s244
      %p253 = scmp.eq.s32.totalorder %s29, 0
      %p254 = por %p252, %p253
      %p255 = scmp.ne.s32.totalorder %s243, %s244
      %p256 = scmp.eq.s32.totalorder %s30, 1
      %p257 = por %p255, %p256
      %p259 = scmp.ne.s32.totalorder %s244, %s258
      %p260 = scmp.eq.s32.totalorder %s30, 0
      %p261 = por %p259, %p260
      %s262 = ssub.s32 %s24, %s31
      %p263 = scmp.eq.s32.totalorder %s262, 0
      %s265 = sadd.s32 %s264, 1
      %s266 = scalar_select %p263, %s264, %s265
      %p269 = pneg %p263
      %p270 = scmp.eq.s32.totalorder %s24, 1
      %p271 = por %p269, %p270
      %p272 = scmp.ne.s32.totalorder %s264, %s267
      %p273 = scmp.eq.s32.totalorder %s24, 0
      %p274 = por %p272, %p273
      %p275 = scmp.ne.s32.totalorder %s264, %s267
      %p276 = scmp.eq.s32.totalorder %s29, 1
      %p277 = por %p275, %p276
      %p278 = scmp.ne.s32.totalorder %s267, %s268
      %p279 = scmp.eq.s32.totalorder %s29, 0
      %p280 = por %p278, %p279
      %p281 = scmp.ne.s32.totalorder %s267, %s268
      %p282 = scmp.eq.s32.totalorder %s30, 1
      %p283 = por %p281, %p282
      %p285 = scmp.ne.s32.totalorder %s268, %s284
      %p286 = scmp.eq.s32.totalorder %s30, 0
      %p287 = por %p285, %p286
      %s288 = ssub.s32 %s24, %s31
      %p289 = scmp.eq.s32.totalorder %s288, 0
      %s291 = sadd.s32 %s290, 1
      %s292 = scalar_select %p289, %s290, %s291
      %p295 = pneg %p289
      %p296 = scmp.eq.s32.totalorder %s24, 1
      %p297 = por %p295, %p296
      %p298 = scmp.ne.s32.totalorder %s290, %s293
      %p299 = scmp.eq.s32.totalorder %s24, 0
      %p300 = por %p298, %p299
      %p301 = scmp.ne.s32.totalorder %s290, %s293
      %p302 = scmp.eq.s32.totalorder %s29, 1
      %p303 = por %p301, %p302
      %p304 = scmp.ne.s32.totalorder %s293, %s294
      %p305 = scmp.eq.s32.totalorder %s29, 0
      %p306 = por %p304, %p305
      %p307 = scmp.ne.s32.totalorder %s293, %s294
      %p308 = scmp.eq.s32.totalorder %s30, 1
      %p309 = por %p307, %p308
      %p311 = scmp.ne.s32.totalorder %s294, %s310
      %p312 = scmp.eq.s32.totalorder %s30, 0
      %p313 = por %p311, %p312
      %p314 = scmp.le.s32.totalorder 1, %s24
      %p315 = scmp.lt.s32.totalorder %s24, 3
      %p316 = pnand %p314, %p315
      %p317 = pneg %p316
      // Predicated region
      $region9: #{tpu_custom_call.1} parent=5 // pred_check
        _
      $region10: #{tpu_custom_call.1} parent=5 // pred_check_branch
        %319 = sbr.rel (%p316) target = $region12
      $region11: #{tpu_custom_call.1} parent=5 // pred_region
        %s320 = ssub.s32 %s24, 1
        // Predicated region
        $region13: #{tpu_custom_call.1} parent=11 // pred_check
          %p321 = pneg %p149
        $region14: #{tpu_custom_call.1} parent=11 // pred_check_branch
          %323 = sbr.rel (%p321) target = $region16
        $region15: #{tpu_custom_call.1} parent=11 // pred_region
          _
        $region16: #{tpu_custom_call.1} parent=11 // pred_fallthru
          _
        // Predicated region
        $region17: #{tpu_custom_call.1} parent=11 // pred_check
          %p324 = pneg %p170
        $region18: #{tpu_custom_call.1} parent=11 // pred_check_branch
          %326 = sbr.rel (%p324) target = $region20
        $region19: #{tpu_custom_call.1} parent=11 // pred_region
          _
        $region20: #{tpu_custom_call.1} parent=11 // pred_fallthru
          _
        // Predicated region
        $region21: #{tpu_custom_call.1} parent=11 // pred_check
          %p327 = pneg %p191
        $region22: #{tpu_custom_call.1} parent=11 // pred_check_branch
          %329 = sbr.rel (%p327) target = $region24
        $region23: #{tpu_custom_call.1} parent=11 // pred_region
          _
        $region24: #{tpu_custom_call.1} parent=11 // pred_fallthru
          _
        // Predicated region
        $region25: #{tpu_custom_call.1} parent=11 // pred_check
          %p330 = pneg %p212
        $region26: #{tpu_custom_call.1} parent=11 // pred_check_branch
          %332 = sbr.rel (%p330) target = $region28
        $region27: #{tpu_custom_call.1} parent=11 // pred_region
          _
        $region28: #{tpu_custom_call.1} parent=11 // pred_fallthru
          _
        // Predicated region
        $region29: #{tpu_custom_call.1} parent=11 // pred_check
          %p333 = pneg %p233
        $region30: #{tpu_custom_call.1} parent=11 // pred_check_branch
          %335 = sbr.rel (%p333) target = $region32
        $region31: #{tpu_custom_call.1} parent=11 // pred_region
          _
        $region32: #{tpu_custom_call.1} parent=11 // pred_fallthru
          _
        // Predicated region
        $region33: #{tpu_custom_call.1} parent=11 // pred_check
          %p336 = pneg %p254
        $region34: #{tpu_custom_call.1} parent=11 // pred_check_branch
          %338 = sbr.rel (%p336) target = $region36
        $region35: #{tpu_custom_call.1} parent=11 // pred_region
          _
        $region36: #{tpu_custom_call.1} parent=11 // pred_fallthru
          _
      $region12: #{tpu_custom_call.1} parent=5 // pred_fallthru
        _
      %p339 = scmp.lt.s32.totalorder %s24, 2
      // Predicated region
      $region37: #{tpu_custom_call.1} parent=5 // pred_check
        %p340 = pneg %p339
      $region38: #{tpu_custom_call.1} parent=5 // pred_check_branch
        %342 = sbr.rel (%p340) target = $region40
      $region39: #{tpu_custom_call.1} parent=5 // pred_region
        // Predicated region
        $region41: #{tpu_custom_call.1} parent=39 // pred_check
          %p343 = pneg %p44
        $region42: #{tpu_custom_call.1} parent=39 // pred_check_branch
          %345 = sbr.rel (%p343) target = $region44
        $region43: #{tpu_custom_call.1} parent=39 // pred_region
          %p346 = scmp.lt.s32.totalorder %s24, 1
          %s347 = scalar_select %p346, %s24, 1
          %s348 = smul.addr %s347, 4
          %s349 = scalar_lea.vmem %s0, %s348
        $region44: #{tpu_custom_call.1} parent=39 // pred_fallthru
          _
        // Predicated region
        $region45: #{tpu_custom_call.1} parent=39 // pred_check
          %p350 = pneg %p70
        $region46: #{tpu_custom_call.1} parent=39 // pred_check_branch
          %352 = sbr.rel (%p350) target = $region48
        $region47: #{tpu_custom_call.1} parent=39 // pred_region
          %p353 = scmp.lt.s32.totalorder %s24, 1
          %s354 = scalar_select %p353, %s24, 1
          %s355 = smul.addr %s354, 4
          %s356 = scalar_lea.vmem %s1, %s355
        $region48: #{tpu_custom_call.1} parent=39 // pred_fallthru
          _
        // Predicated region
        $region49: #{tpu_custom_call.1} parent=39 // pred_check
          %p357 = pneg %p96
        $region50: #{tpu_custom_call.1} parent=39 // pred_check_branch
          %359 = sbr.rel (%p357) target = $region52
        $region51: #{tpu_custom_call.1} parent=39 // pred_region
          %p360 = scmp.lt.s32.totalorder %s24, 1
          %s361 = scalar_select %p360, %s24, 1
          %s362 = scalar_lea.vmem %s2, %s361
        $region52: #{tpu_custom_call.1} parent=39 // pred_fallthru
          _
        // Predicated region
        $region53: #{tpu_custom_call.1} parent=39 // pred_check
          %p363 = pneg %p122
        $region54: #{tpu_custom_call.1} parent=39 // pred_check_branch
          %365 = sbr.rel (%p363) target = $region56
        $region55: #{tpu_custom_call.1} parent=39 // pred_region
          %p366 = scmp.lt.s32.totalorder %s24, 1
          %s367 = scalar_select %p366, %s24, 1
          %s368 = scalar_lea.vmem %s3, %s367
        $region56: #{tpu_custom_call.1} parent=39 // pred_fallthru
          _
      $region40: #{tpu_custom_call.1} parent=5 // pred_fallthru
        _
      %p369 = scmp.le.s32.totalorder 1, %s24
      %p370 = scmp.lt.s32.totalorder %s24, 3
      %p371 = pnand %p369, %p370
      %p372 = pneg %p371
      // Predicated region
      $region57: #{tpu_custom_call.1} parent=5 // pred_check
        _
      $region58: #{tpu_custom_call.1} parent=5 // pred_check_branch
        %374 = sbr.rel (%p371) target = $region60
      $region59: #{tpu_custom_call.1} parent=5 // pred_region
        %s375 = ssub.s32 %s24, 1
        %p376 = scmp.lt.s32.totalorder %s29, 1
        %s377 = scalar_select %p376, %s29, 1
        %s378 = smul.addr %s377, 4
        %s379 = scalar_lea.vmem %s0, %s378
        %p380 = pneg %p50
        %p381 = pneg %p47
        %p382 = scmp.lt.s32.totalorder %s29, 1
        %s383 = scalar_select %p382, %s29, 1
        %s384 = smul.addr %s383, 4
        %s385 = scalar_lea.vmem %s1, %s384
        %p386 = pneg %p76
        %p387 = pneg %p73
        %p388 = scmp.lt.s32.totalorder %s29, 1
        %s389 = scalar_select %p388, %s29, 1
        %s390 = scalar_lea.vmem %s2, %s389
        %p391 = pneg %p102
        %p392 = pneg %p99
        %p393 = scmp.lt.s32.totalorder %s29, 1
        %s394 = scalar_select %p393, %s29, 1
        %s395 = scalar_lea.vmem %s3, %s394
        %p396 = pneg %p128
        %p397 = pneg %p125
        %p398 = pneg %p149
        %p399 = pneg %p146
        %p400 = pneg %p170
        %p401 = pneg %p167
        %p402 = pneg %p191
        %p403 = pneg %p188
        %p404 = pneg %p212
        %p405 = pneg %p209
        %p406 = pneg %p233
        %p407 = pneg %p230
        %p408 = pneg %p254
        %p409 = pneg %p251
        %p410 = pneg %p280
        %p411 = pneg %p277
        %s412 = sand.u32 %s267, 1
        %s413 = scalar_lea.sflag [#allocation3], %s412
        %s414 = sand.u32 %s267, 1
        %s415 = scalar_lea.vmem [#allocation2], %s414
        %p416 = pneg %p306
        %p417 = pneg %p303
        %s418 = sand.u32 %s293, 1
        %s419 = scalar_lea.sflag [#allocation5], %s418
        %s420 = sand.u32 %s293, 1
        %s421 = scalar_lea.vmem [#allocation4], %s420
        %p422 = scmp.lt.s32.totalorder %s29, 1
        %s423 = scalar_select %p422, %s29, 1
        %s424 = smul.addr %s423, 4
        %s425 = scalar_lea.vmem %s0, %s424
        %p426 = scmp.lt.s32.totalorder %s29, 1
        %s427 = scalar_select %p426, %s29, 1
        %s428 = smul.addr %s427, 4
        %s429 = scalar_lea.vmem %s1, %s428
        %p430 = scmp.lt.s32.totalorder %s29, 1
        %s431 = scalar_select %p430, %s29, 1
        %s432 = scalar_lea.vmem %s2, %s431
        %p433 = scmp.lt.s32.totalorder %s29, 1
        %s434 = scalar_select %p433, %s29, 1
        %s435 = scalar_lea.vmem %s3, %s434
        %v436 = vld [vmem:[%s425] sm:$0x7]
        %v437 = vld [vmem:[%s429] sm:$0x7]
        %v438 = vlaneseq
        %v439 = vshrl.u32 %v438, 7
        %v440 = vperm.slane %v436, 0
        %vm441 = vcmp.eq.s32.totalorder %v440, %v439
        %v442 = vsel %vm441, 1, 0
        %v443 = vcvt.s32.f32 %v442
        %v444 = vadd.f32 %v443, 0.0
        %v445 = vperm.slane %v437, 0
        %vm446 = vcmp.eq.s32.totalorder %v445, %v439
        %v447 = vsel %vm446, 1, 0
        %v448 = vcvt.s32.f32 %v447
        %v449 = vadd.f32 %v448, 0.0
        %v450 = vperm.slane %v436, 1
        %vm451 = vcmp.eq.s32.totalorder %v450, %v439
        %v452 = vsel %vm451, 1, 0
        %v453 = vcvt.s32.f32 %v452
        %v454 = vadd.f32 %v444, %v453
        %v455 = vperm.slane %v437, 1
        %vm456 = vcmp.eq.s32.totalorder %v455, %v439
        %v457 = vsel %vm456, 1, 0
        %v458 = vcvt.s32.f32 %v457
        %v459 = vadd.f32 %v449, %v458
        %v460 = vperm.slane %v436, 2
        %vm461 = vcmp.eq.s32.totalorder %v460, %v439
        %v462 = vsel %vm461, 1, 0
        %v463 = vcvt.s32.f32 %v462
        %v464 = vadd.f32 %v454, %v463
        %v465 = vperm.slane %v437, 2
        %vm466 = vcmp.eq.s32.totalorder %v465, %v439
        %v467 = vsel %vm466, 1, 0
        %v468 = vcvt.s32.f32 %v467
        %v469 = vadd.f32 %v459, %v468
        %v470 = vmul.f32 %v464, 0.33333334
        %v471 = vmul.f32 %v469, 0.33333334
        %vm472 = vcmask 48128
        %v474 = vsel %vm472, %v470, 0
        %vm476 = vcmask 1045504
        %v478 = vsel %vm476, %v471, 0
        %480 = vmatpush.msra.mxu0 0.0
        %481 = vmatpush.msra.mxu0 0.0
        %482 = vmatpush.msra.mxu0 0.0
        %483 = vmatpush.msra.mxu0 0.0
        %484 = vmatpush.msra.mxu0 0.0
        %485 = vmatpush.msra.mxu0 0.0
        %486 = vmatpush.msra.mxu0 0.0
        %487 = vmatpush.msra.mxu0 0.0
        %488 = vmatpush.msra.mxu0 0.0
        %489 = vmatpush.msra.mxu0 0.0
        %490 = vmatpush.msra.mxu0 0.0
        %491 = vmatpush.msra.mxu0 0.0
        %492 = vmatpush.msra.mxu0 0.0
        %493 = vmatpush.msra.mxu0 0.0
        %494 = vmatpush.msra.mxu0 0.0
        %495 = vmatpush.msra.mxu0 %v478
        %496 = vmatmul.f32.gmra.mxu0 %v474
        %v497 = vpop.f32.mrf.mxu0
        %v498 = vadd.f32 0.0, %v497
        %499 = vdwg.mxu0
        %v500 = vadd.f32 %v470, %v498
        %v501 = vsel %vm472, %v471, 0
        %503 = vmatpush.msra.mxu0 0.0
        %504 = vmatpush.msra.mxu0 0.0
        %505 = vmatpush.msra.mxu0 0.0
        %506 = vmatpush.msra.mxu0 0.0
        %507 = vmatpush.msra.mxu0 0.0
        %508 = vmatpush.msra.mxu0 0.0
        %509 = vmatpush.msra.mxu0 0.0
        %510 = vmatpush.msra.mxu0 0.0
        %511 = vmatpush.msra.mxu0 0.0
        %512 = vmatpush.msra.mxu0 0.0
        %513 = vmatpush.msra.mxu0 0.0
        %514 = vmatpush.msra.mxu0 0.0
        %515 = vmatpush.msra.mxu0 0.0
        %516 = vmatpush.msra.mxu0 0.0
        %517 = vmatpush.msra.mxu0 0.0
        %518 = vmatpush.msra.mxu0 %v478
        %519 = vmatmul.f32.gmra.mxu0 %v501
        %v520 = vpop.f32.mrf.mxu0
        %v521 = vadd.f32 0.0, %v520
        %522 = vdwg.mxu0
        %v524 = vsel %vm472, %v500, 0
        %v527 = vsel %vm476, %v521, 0
        %529 = vmatpush.msra.mxu0 0.0
        %530 = vmatpush.msra.mxu0 0.0
        %531 = vmatpush.msra.mxu0 0.0
        %532 = vmatpush.msra.mxu0 0.0
        %533 = vmatpush.msra.mxu0 0.0
        %534 = vmatpush.msra.mxu0 0.0
        %535 = vmatpush.msra.mxu0 0.0
        %536 = vmatpush.msra.mxu0 0.0
        %537 = vmatpush.msra.mxu0 0.0
        %538 = vmatpush.msra.mxu0 0.0
        %539 = vmatpush.msra.mxu0 0.0
        %540 = vmatpush.msra.mxu0 0.0
        %541 = vmatpush.msra.mxu0 0.0
        %542 = vmatpush.msra.mxu0 0.0
        %543 = vmatpush.msra.mxu0 0.0
        %544 = vmatpush.msra.mxu0 %v527
        %545 = vmatmul.f32.gmra.mxu0 %v524
        %v546 = vpop.f32.mrf.mxu0
        %v547 = vadd.f32 0.0, %v546
        %548 = vdwg.mxu0
        %v549 = vadd.f32 %v500, %v547
        %v550 = vsel %vm472, %v521, 0
        %552 = vmatpush.msra.mxu0 0.0
        %553 = vmatpush.msra.mxu0 0.0
        %554 = vmatpush.msra.mxu0 0.0
        %555 = vmatpush.msra.mxu0 0.0
        %556 = vmatpush.msra.mxu0 0.0
        %557 = vmatpush.msra.mxu0 0.0
        %558 = vmatpush.msra.mxu0 0.0
        %559 = vmatpush.msra.mxu0 0.0
        %560 = vmatpush.msra.mxu0 0.0
        %561 = vmatpush.msra.mxu0 0.0
        %562 = vmatpush.msra.mxu0 0.0
        %563 = vmatpush.msra.mxu0 0.0
        %564 = vmatpush.msra.mxu0 0.0
        %565 = vmatpush.msra.mxu0 0.0
        %566 = vmatpush.msra.mxu0 0.0
        %567 = vmatpush.msra.mxu0 %v527
        %568 = vmatmul.f32.gmra.mxu0 %v550
        %v569 = vpop.f32.mrf.mxu0
        %v570 = vadd.f32 0.0, %v569
        %571 = vdwg.mxu0
        %v573 = vsel %vm472, %v549, 0
        %v576 = vsel %vm476, %v570, 0
        %578 = vmatpush.msra.mxu0 0.0
        %579 = vmatpush.msra.mxu0 0.0
        %580 = vmatpush.msra.mxu0 0.0
        %581 = vmatpush.msra.mxu0 0.0
        %582 = vmatpush.msra.mxu0 0.0
        %583 = vmatpush.msra.mxu0 0.0
        %584 = vmatpush.msra.mxu0 0.0
        %585 = vmatpush.msra.mxu0 0.0
        %586 = vmatpush.msra.mxu0 0.0
        %587 = vmatpush.msra.mxu0 0.0
        %588 = vmatpush.msra.mxu0 0.0
        %589 = vmatpush.msra.mxu0 0.0
        %590 = vmatpush.msra.mxu0 0.0
        %591 = vmatpush.msra.mxu0 0.0
        %592 = vmatpush.msra.mxu0 0.0
        %593 = vmatpush.msra.mxu0 %v576
        %594 = vmatmul.f32.gmra.mxu0 %v573
        %v595 = vpop.f32.mrf.mxu0
        %v596 = vadd.f32 0.0, %v595
        %597 = vdwg.mxu0
        %v598 = vadd.f32 %v549, %v596
        %v599 = vsel %vm472, %v570, 0
        %601 = vmatpush.msra.mxu0 0.0
        %602 = vmatpush.msra.mxu0 0.0
        %603 = vmatpush.msra.mxu0 0.0
        %604 = vmatpush.msra.mxu0 0.0
        %605 = vmatpush.msra.mxu0 0.0
        %606 = vmatpush.msra.mxu0 0.0
        %607 = vmatpush.msra.mxu0 0.0
        %608 = vmatpush.msra.mxu0 0.0
        %609 = vmatpush.msra.mxu0 0.0
        %610 = vmatpush.msra.mxu0 0.0
        %611 = vmatpush.msra.mxu0 0.0
        %612 = vmatpush.msra.mxu0 0.0
        %613 = vmatpush.msra.mxu0 0.0
        %614 = vmatpush.msra.mxu0 0.0
        %615 = vmatpush.msra.mxu0 0.0
        %616 = vmatpush.msra.mxu0 %v576
        %617 = vmatmul.f32.gmra.mxu0 %v599
        %v618 = vpop.f32.mrf.mxu0
        %v619 = vadd.f32 0.0, %v618
        %620 = vdwg.mxu0
        // While loop
        $region61: #{tpu_custom_call.1} parent=59 // loop_pre_header
          _
        $region62: #{tpu_custom_call.1} parent=59 // loop_header
          %v622 = vphi 0.125, %v657
          %s623 = sphi 0, %s671
          %s624 = sphi inf, %s670
          %p625 = scmp.lt.s32.totalorder %s623, 10000
          %p626 = scmp.gt.f32.partialorder %s624, 1e-05
          %p627 = pnand %p625, %p626
          %p628 = pneg %p627
        $region63: #{tpu_custom_call.1} parent=59 // loop_header_branch
          %630 = sbr.rel (%p627) target = $region67
        $region64: #{tpu_custom_call.1} parent=59 // loop_body
          %v632 = vsel %vm472, %v622, 0
          %v635 = vsel %vm476, %v619, 0
          %637 = vmatpush.msra.mxu0 0.0
          %638 = vmatpush.msra.mxu0 0.0
          %639 = vmatpush.msra.mxu0 0.0
          %640 = vmatpush.msra.mxu0 0.0
          %641 = vmatpush.msra.mxu0 0.0
          %642 = vmatpush.msra.mxu0 0.0
          %643 = vmatpush.msra.mxu0 0.0
          %644 = vmatpush.msra.mxu0 0.0
          %645 = vmatpush.msra.mxu0 0.0
          %646 = vmatpush.msra.mxu0 0.0
          %647 = vmatpush.msra.mxu0 0.0
          %648 = vmatpush.msra.mxu0 0.0
          %649 = vmatpush.msra.mxu0 0.0
          %650 = vmatpush.msra.mxu0 0.0
          %651 = vmatpush.msra.mxu0 0.0
          %652 = vmatpush.msra.mxu0 %v635
          %653 = vmatmul.f32.gmra.mxu0 %v632
          %v654 = vpop.f32.mrf.mxu0
          %v655 = vadd.f32 0.0, %v654
          %656 = vdwg.mxu0
          %v657 = vadd.f32 %v598, %v655
          %v658 = vsub.f32 %v657, %v622
          %v659 = vand.u32 2147483647, %v658
          %v660 = vsel %vm472, %v659, 0.0
          %661 = vadd.xlane.f32.xlu0 %v660
          %v662 = vpop.xlane.xlu0 %661
          %v663 = vrot.slane %v662, 4
          %v664 = vadd.f32 %v662, %v663
          %v665 = vrot.slane %v664, 2
          %v666 = vadd.f32 %v664, %v665
          %v667 = vrot.slane %v666, 1
          %v668 = vadd.f32 %v666, %v667
          %s669 = vtos %v668
          %s670 = smul.f32 %s669, 0.020833334
          %s671 = sadd.s32 %s623, 8
        $region65: #{tpu_custom_call.1} parent=59 // loop_footer
          _
        $region66: #{tpu_custom_call.1} parent=59 // loop_footer_branch
          %621 = sbr.rel target = $region62
        $region67: #{tpu_custom_call.1} parent=59 // loop_exit
          _
        %v672 = vlaneseq
        %v673 = vand.u32 %v672, 127
        %v674 = vld [vmem:[%s432] sm:$0x1]
        %vm675 = vcmp.eq.s32.totalorder %v673, %v439
        %v676 = vsel %vm675, 1, 0
        %v677 = vcvt.s32.f32 %v676
        %v678 = vsub.s32 %v673, 8
        %vm679 = vcmp.eq.s32.totalorder %v678, %v439
        %vm680 = vcmp.lt.s32.totalorder %v673, 13
        %vm681 = vmand %vm679, %vm680
        %v682 = vsel %vm681, 1, 0
        %v683 = vcvt.s32.f32 %v682
        %v684 = vperm.slane %v674, 0
        %vm685 = vcmp.eq.s32.totalorder %v684, %v439
        %v686 = vsel %vm685, 1, 0
        %v687 = vcvt.s32.f32 %v686
        %v688 = vsub.s32 %v674, 8
        %v689 = vperm.slane %v688, 0
        %vm690 = vcmp.eq.s32.totalorder %v689, %v439
        %v691 = vsel %vm690, 1, 0
        %v692 = vcvt.s32.f32 %v691
        %v694 = vsel %vm472, %v622, 0
        %v697 = vsel %vm476, %v683, 0
        %699 = vmatpush.msra.mxu0 0.0
        %700 = vmatpush.msra.mxu0 0.0
        %701 = vmatpush.msra.mxu0 0.0
        %702 = vmatpush.msra.mxu0 0.0
        %703 = vmatpush.msra.mxu0 0.0
        %704 = vmatpush.msra.mxu0 0.0
        %705 = vmatpush.msra.mxu0 0.0
        %706 = vmatpush.msra.mxu0 0.0
        %707 = vmatpush.msra.mxu0 0.0
        %708 = vmatpush.msra.mxu0 0.0
        %709 = vmatpush.msra.mxu0 0.0
        %710 = vmatpush.msra.mxu0 0.0
        %711 = vmatpush.msra.mxu0 0.0
        %712 = vmatpush.msra.mxu0 0.0
        %713 = vmatpush.msra.mxu0 0.0
        %714 = vmatpush.msra.mxu0 %v697
        %715 = vmatmul.f32.gmra.mxu0 %v694
        %v716 = vpop.f32.mrf.mxu0
        %v717 = vadd.f32 0.0, %v716
        %718 = vdwg.mxu0
        %v719 = vadd.f32 %v677, %v717
        %v721 = vsel %vm476, %v692, 0
        %723 = vmatpush.msra.mxu0 0.0
        %724 = vmatpush.msra.mxu0 0.0
        %725 = vmatpush.msra.mxu0 0.0
        %726 = vmatpush.msra.mxu0 0.0
        %727 = vmatpush.msra.mxu0 0.0
        %728 = vmatpush.msra.mxu0 0.0
        %729 = vmatpush.msra.mxu0 0.0
        %730 = vmatpush.msra.mxu0 0.0
        %731 = vmatpush.msra.mxu0 0.0
        %732 = vmatpush.msra.mxu0 0.0
        %733 = vmatpush.msra.mxu0 0.0
        %734 = vmatpush.msra.mxu0 0.0
        %735 = vmatpush.msra.mxu0 0.0
        %736 = vmatpush.msra.mxu0 0.0
        %737 = vmatpush.msra.mxu0 0.0
        %738 = vmatpush.msra.mxu0 %v721
        %739 = vmatmul.f32.gmra.mxu0 %v694
        %v740 = vpop.f32.mrf.mxu0
        %v741 = vadd.f32 0.0, %v740
        %742 = vdwg.mxu0
        %v743 = vadd.f32 %v687, %v741
        %v744 = vld [vmem:[%s4] sm:$0xff]
        %v745 = vld [vmem:[%s4 + $0x8] sm:$0xff]
        %v746 = vld [vmem:[%s4 + $0x10] sm:$0xff]
        %v747 = vld [vmem:[%s4 + $0x18] sm:$0xff]
        %v748 = vld [vmem:[%s5] sm:$0xff]
        %v749 = vld [vmem:[%s5 + $0x8] sm:$0xff]
        %v750 = vld [vmem:[%s5 + $0x10] sm:$0xff]
        %v751 = vld [vmem:[%s5 + $0x18] sm:$0xff]
        %753 = vset.pattern.permute.xlu0 0
        %754 = vperm.xlu0 %753, %v748
        %v755 = vpop.permute.xlu0 %754
        %758 = vset.pattern.permute.xlu0 0
        %759 = vperm.xlu0 %758, %v749
        %v760 = vpop.permute.xlu0 %759
        %763 = vset.pattern.permute.xlu0 0
        %764 = vperm.xlu0 %763, %v750
        %v765 = vpop.permute.xlu0 %764
        %768 = vset.pattern.permute.xlu0 0
        %769 = vperm.xlu0 %768, %v751
        %v770 = vpop.permute.xlu0 %769
        %vm772 = vcmask 130048
        %v774 = vsel %vm772, %v744, 0
        %v777 = vsel %vm772, %v745, 0
        %v780 = vsel %vm772, %v746, 0
        %v783 = vsel %vm772, %v747, 0
        %785 = vmatpush.msra.mxu0 0.0
        %786 = vmatpush.msra.mxu0 0.0
        %787 = vmatpush.msra.mxu0 0.0
        %788 = vmatpush.msra.mxu0 0.0
        %789 = vmatpush.msra.mxu0 0.0
        %790 = vmatpush.msra.mxu0 0.0
        %791 = vmatpush.msra.mxu0 0.0
        %792 = vmatpush.msra.mxu0 0.0
        %793 = vmatpush.msra.mxu0 0.0
        %794 = vmatpush.msra.mxu0 0.0
        %795 = vmatpush.msra.mxu0 0.0
        %796 = vmatpush.msra.mxu0 0.0
        %797 = vmatpush.msra.mxu0 0.0
        %798 = vmatpush.msra.mxu0 0.0
        %799 = vmatpush.msra.mxu0 %v743
        %800 = vmatpush.msra.mxu0 %v719
        %801 = vmatmul.f32.gmra.mxu0 %v774
        %v802 = vpop.f32.mrf.mxu0
        %v803 = vadd.f32 %v755, %v802
        %804 = vmatmul.f32.gmra.mxu0 %v777
        %v805 = vpop.f32.mrf.mxu0
        %v806 = vadd.f32 %v760, %v805
        %807 = vmatmul.f32.gmra.mxu0 %v780
        %v808 = vpop.f32.mrf.mxu0
        %v809 = vadd.f32 %v765, %v808
        %810 = vmatmul.f32.gmra.mxu0 %v783
        %v811 = vpop.f32.mrf.mxu0
        %v812 = vadd.f32 %v770, %v811
        %813 = vdwg.mxu0
        %vm814 = vcmp.gt.f32.partialorder %v803, 0.0
        %vm815 = vcmp.gt.f32.partialorder %v806, 0.0
        %vm816 = vcmp.gt.f32.partialorder %v809, 0.0
        %vm817 = vcmp.gt.f32.partialorder %v812, 0.0
        %v818 = vmin.f32 %v803, 0.0
        %v819 = vmin.f32 %v806, 0.0
        %v820 = vmin.f32 %v809, 0.0
        %v821 = vmin.f32 %v812, 0.0
        %v822 = vmul.f32 %v818, 1.442695
        %v823 = vpow.pop %v822
        %v824 = vmul.f32 %v819, 1.442695
        %v825 = vpow.pop %v824
        %v826 = vmul.f32 %v820, 1.442695
        %v827 = vpow.pop %v826
        %v828 = vmul.f32 %v821, 1.442695
        %v829 = vpow.pop %v828
        %v830 = vsub.f32 %v823, 1.0
        %v831 = vsub.f32 %v825, 1.0
        %v832 = vsub.f32 %v827, 1.0
        %v833 = vsub.f32 %v829, 1.0
        %v834 = vsel %vm814, %v803, %v830
        %v835 = vsel %vm815, %v806, %v831
        %v836 = vsel %vm816, %v809, %v832
        %v837 = vsel %vm817, %v812, %v833
        %v838 = vld [vmem:[%s6] sm:$0xff]
        %v839 = vld [vmem:[%s6 + $0x8] sm:$0xff]
        %v840 = vld [vmem:[%s6 + $0x10] sm:$0xff]
        %v841 = vld [vmem:[%s6 + $0x18] sm:$0xff]
        %v842 = vld [vmem:[%s7] sm:$0xff]
        %v843 = vld [vmem:[%s7 + $0x8] sm:$0xff]
        %v844 = vld [vmem:[%s7 + $0x10] sm:$0xff]
        %v845 = vld [vmem:[%s7 + $0x18] sm:$0xff]
        %847 = vset.pattern.permute.xlu0 0
        %848 = vperm.xlu0 %847, %v842
        %v849 = vpop.permute.xlu0 %848
        %852 = vset.pattern.permute.xlu0 0
        %853 = vperm.xlu0 %852, %v843
        %v854 = vpop.permute.xlu0 %853
        %857 = vset.pattern.permute.xlu0 0
        %858 = vperm.xlu0 %857, %v844
        %v859 = vpop.permute.xlu0 %858
        %862 = vset.pattern.permute.xlu0 0
        %863 = vperm.xlu0 %862, %v845
        %v864 = vpop.permute.xlu0 %863
        %vm866 = vcmask 261120
        %v868 = vsel %vm866, %v838, 0
        %v871 = vsel %vm866, %v839, 0
        %v874 = vsel %vm866, %v840, 0
        %v877 = vsel %vm866, %v841, 0
        %879 = vmatpush.msra.mxu0 0.0
        %880 = vmatpush.msra.mxu0 0.0
        %881 = vmatpush.msra.mxu0 0.0
        %882 = vmatpush.msra.mxu0 0.0
        %883 = vmatpush.msra.mxu0 0.0
        %884 = vmatpush.msra.mxu0 0.0
        %885 = vmatpush.msra.mxu0 0.0
        %886 = vmatpush.msra.mxu0 0.0
        %887 = vmatpush.msra.mxu0 0.0
        %888 = vmatpush.msra.mxu0 0.0
        %889 = vmatpush.msra.mxu0 0.0
        %890 = vmatpush.msra.mxu0 0.0
        %891 = vmatpush.msra.mxu0 %v837
        %892 = vmatpush.msra.mxu0 %v836
        %893 = vmatpush.msra.mxu0 %v835
        %894 = vmatpush.msra.mxu0 %v834
        %895 = vmatmul.f32.gmra.mxu0 %v868
        %v896 = vpop.f32.mrf.mxu0
        %v897 = vadd.f32 %v849, %v896
        %898 = vmatmul.f32.gmra.mxu0 %v871
        %v899 = vpop.f32.mrf.mxu0
        %v900 = vadd.f32 %v854, %v899
        %901 = vmatmul.f32.gmra.mxu0 %v874
        %v902 = vpop.f32.mrf.mxu0
        %v903 = vadd.f32 %v859, %v902
        %904 = vmatmul.f32.gmra.mxu0 %v877
        %v905 = vpop.f32.mrf.mxu0
        %v906 = vadd.f32 %v864, %v905
        %907 = vdwg.mxu0
        %vm908 = vcmp.gt.f32.partialorder %v897, 0.0
        %vm909 = vcmp.gt.f32.partialorder %v900, 0.0
        %vm910 = vcmp.gt.f32.partialorder %v903, 0.0
        %vm911 = vcmp.gt.f32.partialorder %v906, 0.0
        %v912 = vmin.f32 %v897, 0.0
        %v913 = vmin.f32 %v900, 0.0
        %v914 = vmin.f32 %v903, 0.0
        %v915 = vmin.f32 %v906, 0.0
        %v916 = vmul.f32 %v912, 1.442695
        %v917 = vpow.pop %v916
        %v918 = vmul.f32 %v913, 1.442695
        %v919 = vpow.pop %v918
        %v920 = vmul.f32 %v914, 1.442695
        %v921 = vpow.pop %v920
        %v922 = vmul.f32 %v915, 1.442695
        %v923 = vpow.pop %v922
        %v924 = vsub.f32 %v917, 1.0
        %v925 = vsub.f32 %v919, 1.0
        %v926 = vsub.f32 %v921, 1.0
        %v927 = vsub.f32 %v923, 1.0
        %v928 = vsel %vm908, %v897, %v924
        %v929 = vsel %vm909, %v900, %v925
        %v930 = vsel %vm910, %v903, %v926
        %v931 = vsel %vm911, %v906, %v927
        %v932 = vld [vmem:[%s8] sm:$0xff]
        %v933 = vld [vmem:[%s8 + $0x8] sm:$0xff]
        %v934 = vld [vmem:[%s8 + $0x10] sm:$0xff]
        %v935 = vld [vmem:[%s8 + $0x18] sm:$0xff]
        %v936 = vld [vmem:[%s9] sm:$0x1]
        %938 = vset.pattern.permute.xlu0 0
        %939 = vperm.xlu0 %938, %v932
        %v940 = vpop.permute.xlu0 %939
        %943 = vset.pattern.permute.xlu0 0
        %944 = vperm.xlu0 %943, %v933
        %v945 = vpop.permute.xlu0 %944
        %948 = vset.pattern.permute.xlu0 0
        %949 = vperm.xlu0 %948, %v934
        %v950 = vpop.permute.xlu0 %949
        %953 = vset.pattern.permute.xlu0 0
        %954 = vperm.xlu0 %953, %v935
        %v955 = vpop.permute.xlu0 %954
        %v957 = vmul.f32 %v928, %v940
        %v958 = vmul.f32 %v929, %v945
        %v959 = vmul.f32 %v930, %v950
        %v960 = vmul.f32 %v931, %v955
        %v961 = vadd.f32 %v957, %v958
        %v962 = vadd.f32 %v961, %v959
        %v963 = vadd.f32 %v962, %v960
        %v964 = vrot.slane %v963, 4
        %v965 = vadd.f32 %v963, %v964
        %v966 = vrot.slane %v965, 2
        %v967 = vadd.f32 %v965, %v966
        %v968 = vrot.slane %v967, 1
        %v969 = vadd.f32 %v967, %v968
        %971 = vset.pattern.permute.xlu0 0
        %972 = vperm.xlu0 %971, %v936
        %v973 = vpop.permute.xlu0 %972
        %v975 = vperm.slane %v973, 0
        %v976 = vadd.f32 %v969, %v975
        %977 = vset.pattern.permute.xlu0 1
        %978 = vperm.xlu0 %977, %v932
        %v979 = vpop.permute.xlu0 %978
        %981 = vset.pattern.permute.xlu0 1
        %982 = vperm.xlu0 %981, %v933
        %v983 = vpop.permute.xlu0 %982
        %985 = vset.pattern.permute.xlu0 1
        %986 = vperm.xlu0 %985, %v934
        %v987 = vpop.permute.xlu0 %986
        %989 = vset.pattern.permute.xlu0 1
        %990 = vperm.xlu0 %989, %v935
        %v991 = vpop.permute.xlu0 %990
        %v993 = vmul.f32 %v928, %v979
        %v994 = vmul.f32 %v929, %v983
        %v995 = vmul.f32 %v930, %v987
        %v996 = vmul.f32 %v931, %v991
        %v997 = vadd.f32 %v993, %v994
        %v998 = vadd.f32 %v997, %v995
        %v999 = vadd.f32 %v998, %v996
        %v1000 = vrot.slane %v999, 4
        %v1001 = vadd.f32 %v999, %v1000
        %v1002 = vrot.slane %v1001, 2
        %v1003 = vadd.f32 %v1001, %v1002
        %v1004 = vrot.slane %v1003, 1
        %v1005 = vadd.f32 %v1003, %v1004
        %1006 = vset.pattern.permute.xlu0 1
        %1007 = vperm.xlu0 %1006, %v936
        %v1008 = vpop.permute.xlu0 %1007
        %v1010 = vperm.slane %v1008, 0
        %v1011 = vadd.f32 %v1005, %v1010
        %v1012 = vld [vmem:[%s435] sm:$0x1]
        %v1013 = vmul.f32 %v1011, 1.442695
        %v1014 = vpow.pop %v1013
        %v1015 = vmul.f32 %v1012, %v1014
        %v1016 = vadd.f32 %v1015, %v976
        %v1017 = vsub.f32 %v1016, 2.0
        %1018 = vst [vmem:[%s415] sm:$0x1] %v1017
        %v1019 = vsel %vm680, 1, 0
        %v1020 = vcvt.s32.f32 %v1019
        %v1021 = vmul.f32 %v1012, 0.5
        %v1022 = vmul.f32 %v1021, %v1012
        %v1023 = vsub.f32 -0.9189385, %v1022
        %v1024 = vsub.f32 %v1023, %v1011
        %v1025 = vmul.f32 %v1024, %v1020
        %vm1026 = vcmask 1040384
        %v1027 = vsel %vm1026, %v1025, 0.0
        %1028 = vadd.xlane.f32.xlu0 %v1027
        %v1029 = vpop.xlane.xlu0 %1028
        %v1030 = vadd.f32 %v1029, 0.0
        %1031 = vst [vmem:[%s421] sm:$0x1] %v1030
        %s1032 = sand.u32 %s267, 1
        %s1033 = scalar_lea.sflag [#allocation3], %s1032
        %s1034 = sand.u32 %s267, 1
        %s1035 = scalar_lea.vmem [#allocation2], %s1034
        %s1036 = sand.u32 %s293, 1
        %s1037 = scalar_lea.sflag [#allocation5], %s1036
        %s1038 = sand.u32 %s293, 1
        %s1039 = scalar_lea.vmem [#allocation4], %s1038
        // Predicated region
        $region68: #{tpu_custom_call.1} parent=59 // pred_check
          %p1040 = pneg %p277
        $region69: #{tpu_custom_call.1} parent=59 // pred_check_branch
          %1042 = sbr.rel (%p1040) target = $region71
        $region70: #{tpu_custom_call.1} parent=59 // pred_region
          %1044 = vsyncadd %s1033, 0
          %s1045 = scalar_lea.hbm %s10, %s29
          %s1047 = sshll.u32 %s1035, 4
          %s1048 = int_to_ptr.vmem [resolvable:$true] %s1047
          %s1049 = sshll.u32 %s1045, 4
          %s1050 = int_to_ptr.hbm [resolvable:$true] %s1049
          %1052 = dma.vmem_to_hbm [thread:$0]  %s1048, 16, %s1050, %s1033
        $region71: #{tpu_custom_call.1} parent=59 // pred_fallthru
          _
        // Predicated region
        $region72: #{tpu_custom_call.1} parent=59 // pred_check
          %p1053 = pneg %p303
        $region73: #{tpu_custom_call.1} parent=59 // pred_check_branch
          %1055 = sbr.rel (%p1053) target = $region75
        $region74: #{tpu_custom_call.1} parent=59 // pred_region
          %1057 = vsyncadd %s1037, 0
          %s1058 = scalar_lea.hbm %s11, %s29
          %s1060 = sshll.u32 %s1039, 4
          %s1061 = int_to_ptr.vmem [resolvable:$true] %s1060
          %s1062 = sshll.u32 %s1058, 4
          %s1063 = int_to_ptr.hbm [resolvable:$true] %s1062
          %1065 = dma.vmem_to_hbm [thread:$0]  %s1061, 16, %s1063, %s1037
        $region75: #{tpu_custom_call.1} parent=59 // pred_fallthru
          _
      $region60: #{tpu_custom_call.1} parent=5 // pred_fallthru
        _
      %p1066 = scmp.le.s32.totalorder 2, %s24
      // Predicated region
      $region76: #{tpu_custom_call.1} parent=5 // pred_check
        %p1067 = pneg %p1066
      $region77: #{tpu_custom_call.1} parent=5 // pred_check_branch
        %1069 = sbr.rel (%p1067) target = $region79
      $region78: #{tpu_custom_call.1} parent=5 // pred_region
        %s1070 = ssub.s32 %s24, 2
        // Predicated region
        $region80: #{tpu_custom_call.1} parent=78 // pred_check
          %p1071 = pneg %p283
        $region81: #{tpu_custom_call.1} parent=78 // pred_check_branch
          %1073 = sbr.rel (%p1071) target = $region83
        $region82: #{tpu_custom_call.1} parent=78 // pred_region
          %s1074 = sand.u32 %s268, 1
          %s1075 = scalar_lea.sflag [#allocation3], %s1074
          %s1076 = sand.u32 %s268, 1
          %s1077 = scalar_lea.vmem [#allocation2], %s1076
          %1079 = dma.done %s1075, 16
        $region83: #{tpu_custom_call.1} parent=78 // pred_fallthru
          _
        // Predicated region
        $region84: #{tpu_custom_call.1} parent=78 // pred_check
          %p1080 = pneg %p309
        $region85: #{tpu_custom_call.1} parent=78 // pred_check_branch
          %1082 = sbr.rel (%p1080) target = $region87
        $region86: #{tpu_custom_call.1} parent=78 // pred_region
          %s1083 = sand.u32 %s294, 1
          %s1084 = scalar_lea.sflag [#allocation5], %s1083
          %s1085 = sand.u32 %s294, 1
          %s1086 = scalar_lea.vmem [#allocation4], %s1085
          %1088 = dma.done %s1084, 16
        $region87: #{tpu_custom_call.1} parent=78 // pred_fallthru
          _
      $region79: #{tpu_custom_call.1} parent=5 // pred_fallthru
        _
    $region6: #{tpu_custom_call.1} parent=1 // loop_footer
      %s28 = sadd.s32 1, %s24
    $region7: #{tpu_custom_call.1} parent=1 // loop_footer_branch
      %23 = sbr.rel target = $region3
    $region8: #{tpu_custom_call.1} parent=1 // loop_exit
      _
    %1089 = vsyncpa [#allocation3], 1
    %s1090 = scalar_lea.sflag [#allocation3], 1
    %1091 = vsyncpa %s1090, 1
    %1092 = vsyncpa [#allocation5], 1
    %s1093 = scalar_lea.sflag [#allocation5], 1
    %1094 = vsyncpa %s1093, 1

</llo_original>
